<compile_context>
chip_gen: v7x
topology: tpu7x:2x2x1
jax: 0.10.0
libtpu: 0.0.40
codegen_flags: <defaults>
</compile_context>

<pallas_src>
import functools
import math

import jax
import jax.numpy as jnp
from jax.experimental import pallas as pl
from jax.experimental.pallas import tpu as pltpu

# --- tiny synthetic RoBERTa config -----------------------------------------
VOCAB = 100
HIDDEN = 32
N_HEADS = 2
HEAD_DIM = HIDDEN // N_HEADS
FFN = 64
N_LAYERS = 2
MAX_POS = 64
PAD_ID = 1          # RoBERTa padding_idx
LN_EPS = 1e-5

# Embedding-table row layout (word | position | type-0 | emb-LN gamma | beta).
TYPE_ROW = VOCAB + MAX_POS
EMB_G_ROW = TYPE_ROW + 1
EMB_B_ROW = TYPE_ROW + 2
EMB_ROWS = ((EMB_B_ROW + 1 + 7) // 8) * 8        # pad rows to a sublane multiple

# Vector-slab row layout (per layer, one [8, 128] tile).
ROW_BQKV, ROW_BO, ROW_BI, ROW_BF = 0, 1, 2, 3
ROW_L1G, ROW_L1B, ROW_L2G, ROW_L2B = 4, 5, 6, 7


# ============================ shared math helpers ===========================

def _layer_norm(h, g, b):
    mu = jnp.mean(h, axis=-1, keepdims=True)
    var = jnp.mean((h - mu) * (h - mu), axis=-1, keepdims=True)
    return (h - mu) * jax.lax.rsqrt(var + LN_EPS) * g + b


def _gelu(x):
    # TODO(synk): HF RoBERTa default is exact erf GELU; tanh approx ~1e-3 diff.
    c = jnp.sqrt(2.0 / jnp.pi).astype(x.dtype)
    return 0.5 * x * (1.0 + jnp.tanh(c * (x + 0.044715 * x * x * x)))


# =========================== fused Pallas kernel ============================

def _roberta_kernel(tok_ref, emb_ref, wqkv_ref, wo_ref, wi_ref, wf_ref, vec_ref,
                    o_ref, *, seq):
    """One batch element per grid step; entire encoder forward in VMEM."""
    S = seq
    D = HEAD_DIM

    tok = tok_ref[...]                              # [S, 2] int32: (token id, len)
    ids_col = tok[:, 0:1]                           # [S, 1]
    len_col = tok[:, 1:2]                           # [S, 1] (same value every row)

    # ---- embeddings: word + position + type-0 in ONE one-hot MXU matmul ----
    row_pos = jax.lax.broadcasted_iota(jnp.int32, (S, 1), 0)
    valid = row_pos < len_col                                        # [S, 1]
    pos_ids = jnp.where(valid, row_pos + 1 + PAD_ID, PAD_ID)         # RoBERTa ids
    col = jax.lax.broadcasted_iota(jnp.int32, (S, EMB_ROWS), 1)
    onehot = ((col == ids_col) |
              (col == VOCAB + pos_ids) |
              (col == TYPE_ROW)).astype(jnp.float32)                 # [S, EMB_ROWS]
    h = jnp.dot(onehot, emb_ref[...],
                preferred_element_type=jnp.float32)                  # [S, H]
    h = _layer_norm(h,
                    emb_ref[EMB_G_ROW:EMB_G_ROW + 1, :],
                    emb_ref[EMB_B_ROW:EMB_B_ROW + 1, :])

    # ---- additive key mask built in-kernel from lens ------------------------
    key_pos = jax.lax.broadcasted_iota(jnp.int32, (1, S), 1)
    bias = jnp.where(key_pos < len_col[0:1, 0:1], 0.0, -10000.0)     # [1, S]

    # ---- encoder layers (static unroll; weights resident in VMEM) ----------
    for l in range(N_LAYERS):
        vec = vec_ref[l]                                             # [8, 128]

        # fused QKV: single [S,H] x [H,3H] matmul (softmax scale folded in Wq)
        qkv = jnp.dot(h, wqkv_ref[l], preferred_element_type=jnp.float32)
        qkv = qkv + vec[ROW_BQKV:ROW_BQKV + 1, 0:3 * HIDDEN]         # [S, 3H]

        ctx = []
        for hd in range(N_HEADS):
            q = qkv[:, hd * D:(hd + 1) * D]                          # [S, D]
            k = qkv[:, (N_HEADS + hd) * D:(N_HEADS + hd + 1) * D]
            v = qkv[:, (2 * N_HEADS + hd) * D:(2 * N_HEADS + hd + 1) * D]
            s = jnp.einsum('qd,kd->qk', q, k,
                           preferred_element_type=jnp.float32) + bias
            m = jnp.max(s, axis=-1, keepdims=True)
            e = jnp.exp(s - m)
            p = e / jnp.sum(e, axis=-1, keepdims=True)               # exact softmax
            ctx.append(jnp.dot(p, v, preferred_element_type=jnp.float32))
        ctx = jnp.concatenate(ctx, axis=-1)                          # [S, H]

        # single all-head output projection
        attn = jnp.dot(ctx, wo_ref[l], preferred_element_type=jnp.float32)
        attn = attn + vec[ROW_BO:ROW_BO + 1, 0:HIDDEN]
        h = _layer_norm(attn + h,
                        vec[ROW_L1G:ROW_L1G + 1, 0:HIDDEN],
                        vec[ROW_L1B:ROW_L1B + 1, 0:HIDDEN])

        # feed-forward
        inter = jnp.dot(h, wi_ref[l], preferred_element_type=jnp.float32)
        inter = _gelu(inter + vec[ROW_BI:ROW_BI + 1, 0:FFN])
        ffn = jnp.dot(inter, wf_ref[l], preferred_element_type=jnp.float32)
        ffn = ffn + vec[ROW_BF:ROW_BF + 1, 0:HIDDEN]
        h = _layer_norm(ffn + h,
                        vec[ROW_L2G:ROW_L2G + 1, 0:HIDDEN],
                        vec[ROW_L2B:ROW_L2B + 1, 0:HIDDEN])

    o_ref[...] = h.astype(o_ref.dtype)
    # TODO(synk): dropout omitted (eval-mode semantics).
    # TODO(synk): at real RoBERTa sizes switch to bf16 matmul operands and a
    #             per-layer weight-streaming pipeline (weights won't fit VMEM).


# ============================ params (synthetic) ============================

def _init(key, shape, scale=0.02):
    return scale * jax.random.normal(key, shape, dtype=jnp.float32)


def init_params(key):
    """Checkpoint-like parameter shapes (synthetic values)."""
    keys = iter(jax.random.split(key, 8 + 16 * N_LAYERS))
    params = {
        "word_emb": _init(next(keys), (VOCAB, HIDDEN)),
        "pos_emb":  _init(next(keys), (MAX_POS, HIDDEN)),
        "type_emb": _init(next(keys), (2, HIDDEN)),
        "emb_ln_g": jnp.ones((HIDDEN,), jnp.float32),
        "emb_ln_b": jnp.zeros((HIDDEN,), jnp.float32),
        "layers": [],
    }
    for _ in range(N_LAYERS):
        layer = {
            "wq": _init(next(keys), (HIDDEN, HIDDEN)), "bq": jnp.zeros((HIDDEN,), jnp.float32),
            "wk": _init(next(keys), (HIDDEN, HIDDEN)), "bk": jnp.zeros((HIDDEN,), jnp.float32),
            "wv": _init(next(keys), (HIDDEN, HIDDEN)), "bv": jnp.zeros((HIDDEN,), jnp.float32),
            "wo": _init(next(keys), (HIDDEN, HIDDEN)), "bo": jnp.zeros((HIDDEN,), jnp.float32),
            "ln1_g": jnp.ones((HIDDEN,), jnp.float32), "ln1_b": jnp.zeros((HIDDEN,), jnp.float32),
            "wi": _init(next(keys), (HIDDEN, FFN)),    "bi": jnp.zeros((FFN,), jnp.float32),
            "wf": _init(next(keys), (FFN, HIDDEN)),    "bf": jnp.zeros((HIDDEN,), jnp.float32),
            "ln2_g": jnp.ones((HIDDEN,), jnp.float32), "ln2_b": jnp.zeros((HIDDEN,), jnp.float32),
        }
        params["layers"].append(layer)
    return params


def pack_params(raw):
    """Pack weights into a handful of kernel-friendly slabs."""
    scale = 1.0 / math.sqrt(HEAD_DIM)

    emb = jnp.concatenate([
        raw["word_emb"],                              # rows [0, VOCAB)
        raw["pos_emb"],                               # rows [VOCAB, VOCAB+MAX_POS)
        raw["type_emb"][0:1],                         # TYPE_ROW
        raw["emb_ln_g"].reshape(1, HIDDEN),           # EMB_G_ROW
        raw["emb_ln_b"].reshape(1, HIDDEN),           # EMB_B_ROW
    ], axis=0)
    emb = jnp.pad(emb, ((0, EMB_ROWS - emb.shape[0]), (0, 0)))

    def pad128(v):
        return jnp.pad(v, (0, 128 - v.shape[0]))

    w_qkv, w_o, w_i, w_f, vec = [], [], [], [], []
    for lyr in raw["layers"]:
        # softmax scale folded into Q projection (weights AND bias)
        w_qkv.append(jnp.concatenate([lyr["wq"] * scale, lyr["wk"], lyr["wv"]], axis=1))
        w_o.append(lyr["wo"])
        w_i.append(lyr["wi"])
        w_f.append(lyr["wf"])
        vec.append(jnp.stack([
            pad128(jnp.concatenate([lyr["bq"] * scale, lyr["bk"], lyr["bv"]])),
            pad128(lyr["bo"]), pad128(lyr["bi"]), pad128(lyr["bf"]),
            pad128(lyr["ln1_g"]), pad128(lyr["ln1_b"]),
            pad128(lyr["ln2_g"]), pad128(lyr["ln2_b"]),
        ], axis=0))                                   # [8, 128]

    return {
        "emb": emb,                                   # [EMB_ROWS, H]
        "w_qkv": jnp.stack(w_qkv),                    # [L, H, 3H]
        "w_o": jnp.stack(w_o),                        # [L, H, H]
        "w_i": jnp.stack(w_i),                        # [L, H, F]
        "w_f": jnp.stack(w_f),                        # [L, F, H]
        "vec": jnp.stack(vec),                        # [L, 8, 128]
    }


# =============================== forward ====================================

@jax.jit
def roberta_embedding_forward(p, x_ids, lens):
    """Equivalent of RobertaEmbedding.forward(x, lens): last hidden state."""
    B, S = x_ids.shape

    # Token ids + (broadcast) lengths packed into one tiny int32 input so the
    # kernel can build the mask / position ids / one-hot gather itself.
    lens_b = jnp.broadcast_to(lens.reshape(B, 1).astype(jnp.int32), (B, S))
    tok = jnp.stack([x_ids.astype(jnp.int32), lens_b], axis=-1).reshape(B * S, 2)

    out2d = pl.pallas_call(
        functools.partial(_roberta_kernel, seq=S),
        grid=(B,),
        in_specs=[
            pl.BlockSpec((S, 2), lambda b: (b, 0)),                          # tok
            pl.BlockSpec((EMB_ROWS, HIDDEN), lambda b: (0, 0)),              # emb table
            pl.BlockSpec((N_LAYERS, HIDDEN, 3 * HIDDEN), lambda b: (0, 0, 0)),  # w_qkv
            pl.BlockSpec((N_LAYERS, HIDDEN, HIDDEN), lambda b: (0, 0, 0)),   # w_o
            pl.BlockSpec((N_LAYERS, HIDDEN, FFN), lambda b: (0, 0, 0)),      # w_i
            pl.BlockSpec((N_LAYERS, FFN, HIDDEN), lambda b: (0, 0, 0)),      # w_f
            pl.BlockSpec((N_LAYERS, 8, 128), lambda b: (0, 0, 0)),           # vec slab
        ],
        out_specs=pl.BlockSpec((S, HIDDEN), lambda b: (b, 0)),
        out_shape=jax.ShapeDtypeStruct((B * S, HIDDEN), jnp.float32),
        compiler_params=pltpu.CompilerParams(
            dimension_semantics=("parallel",)),        # shard batch over TCs (v7x)
    )(tok, p["emb"], p["w_qkv"], p["w_o"], p["w_i"], p["w_f"], p["vec"])

    # Pooler output is discarded by RobertaEmbedding.forward — not computed.
    return out2d.reshape(B, S, HIDDEN)


# ====================== pure-JAX reference (for checking) ===================

def reference_forward(raw, x_ids, lens):
    B, S = x_ids.shape
    pos = jnp.arange(S, dtype=jnp.int32)
    mask = pos[None, :] < lens[:, None]                               # [B, S]
    bias = jnp.where(mask, 0.0, -10000.0)[:, None, None, :]           # [B,1,1,S]
    pos_ids = jnp.where(mask, pos[None, :] + 1 + PAD_ID, PAD_ID)

    h = raw["word_emb"][x_ids] + raw["pos_emb"][pos_ids] + raw["type_emb"][0]
    h = _layer_norm(h, raw["emb_ln_g"], raw["emb_ln_b"])
    scale = 1.0 / math.sqrt(HEAD_DIM)
    for lyr in raw["layers"]:
        q = (h @ lyr["wq"] + lyr["bq"]).reshape(B, S, N_HEADS, HEAD_DIM)
        k = (h @ lyr["wk"] + lyr["bk"]).reshape(B, S, N_HEADS, HEAD_DIM)
        v = (h @ lyr["wv"] + lyr["bv"]).reshape(B, S, N_HEADS, HEAD_DIM)
        s = jnp.einsum('bqhd,bkhd->bhqk', q, k) * scale + bias
        p = jax.nn.softmax(s, axis=-1)
        ctx = jnp.einsum('bhqk,bkhd->bqhd', p, v).reshape(B, S, HIDDEN)
        attn = ctx @ lyr["wo"] + lyr["bo"]
        h = _layer_norm(attn + h, lyr["ln1_g"], lyr["ln1_b"])
        inter = _gelu(h @ lyr["wi"] + lyr["bi"])
        ffn = inter @ lyr["wf"] + lyr["bf"]
        h = _layer_norm(ffn + h, lyr["ln2_g"], lyr["ln2_b"])
    return h


# ================================ main ======================================

if __name__ == "__main__":
    key = jax.random.PRNGKey(0)
    B, S = 2, 8

    # token ids with RoBERTa-style padding (pad id = 1 beyond each length)
    lens = jnp.array([8, 5], dtype=jnp.int32)
    ids = jax.random.randint(jax.random.fold_in(key, 123), (B, S), 3, VOCAB,
                             dtype=jnp.int32)
    ids = jnp.where(jnp.arange(S)[None, :] < lens[:, None], ids, PAD_ID)

    raw_params = init_params(jax.random.fold_in(key, 7))
    packed = pack_params(raw_params)

    out = roberta_embedding_forward(packed, ids, lens)
    out = jax.block_until_ready(out)

    assert out.shape == (B, S, HIDDEN), out.shape
    assert out.dtype == jnp.float32
    assert bool(jnp.all(jnp.isfinite(out)))

    ref = reference_forward(raw_params, ids, lens)
    err = float(jnp.max(jnp.abs(out - ref)))
    assert err < 5e-3, f"max abs err vs pure-JAX reference = {err}"

    print("KERNEL_OK")
</pallas_src>

<mosaic_0001>
module attributes {stable_mosaic.version = 11 : i64} {
  func.func @_roberta_kernel(%arg0: i32, %arg1: memref<8x2xi32, #tpu.memory_space<vmem>>, %arg2: memref<168x32xf32, #tpu.memory_space<vmem>>, %arg3: memref<2x32x96xf32, #tpu.memory_space<vmem>>, %arg4: memref<2x32x32xf32, #tpu.memory_space<vmem>>, %arg5: memref<2x32x64xf32, #tpu.memory_space<vmem>>, %arg6: memref<2x64x32xf32, #tpu.memory_space<vmem>>, %arg7: memref<2x8x128xf32, #tpu.memory_space<vmem>>, %arg8: memref<8x32xf32, #tpu.memory_space<vmem>>) attributes {dimension_semantics = [#tpu.dimension_semantics<parallel>], iteration_bounds = array<i64: 2>, scalar_prefetch = 0 : i64, scratch_operands = 0 : i64, tpu.core_type = #tpu.core_type<tc>, window_params = [{transform_indices = @transform_0, window_bounds = array<i64: 8, 2>}, {pipeline_mode = #tpu.pipeline_mode<synchronous>, transform_indices = @transform_1, window_bounds = array<i64: 168, 32>}, {pipeline_mode = #tpu.pipeline_mode<synchronous>, transform_indices = @transform_2, window_bounds = array<i64: 2, 32, 96>}, {pipeline_mode = #tpu.pipeline_mode<synchronous>, transform_indices = @transform_3, window_bounds = array<i64: 2, 32, 32>}, {pipeline_mode = #tpu.pipeline_mode<synchronous>, transform_indices = @transform_4, window_bounds = array<i64: 2, 32, 64>}, {pipeline_mode = #tpu.pipeline_mode<synchronous>, transform_indices = @transform_5, window_bounds = array<i64: 2, 64, 32>}, {pipeline_mode = #tpu.pipeline_mode<synchronous>, transform_indices = @transform_6, window_bounds = array<i64: 2, 8, 128>}, {transform_indices = @transform_7, window_bounds = array<i64: 8, 32>}]} {
    %c0 = arith.constant 0 : index
    %c0_0 = arith.constant 0 : index
    %0 = vector.load %arg1[%c0, %c0_0] : memref<8x2xi32, #tpu.memory_space<vmem>>, vector<8x2xi32>
    %1 = vector.extract_strided_slice %0 {offsets = [0, 0], sizes = [8, 1], strides = [1, 1]} : vector<8x2xi32> to vector<8x1xi32>
    %2 = vector.extract_strided_slice %0 {offsets = [0, 1], sizes = [8, 1], strides = [1, 1]} : vector<8x2xi32> to vector<8x1xi32>
    %3 = tpu.iota {dimensions = array<i32: 0>} : vector<8x1xi32>
    %4 = arith.cmpi slt, %3, %2 : vector<8x1xi32>
    %c1_i32 = arith.constant 1 : i32
    %5 = vector.broadcast %c1_i32 : i32 to vector<8x1xi32>
    %6 = arith.addi %3, %5 : vector<8x1xi32>
    %c1_i32_1 = arith.constant 1 : i32
    %7 = vector.broadcast %c1_i32_1 : i32 to vector<8x1xi32>
    %8 = arith.addi %6, %7 : vector<8x1xi32>
    %c1_i32_2 = arith.constant 1 : i32
    %9 = vector.broadcast %c1_i32_2 : i32 to vector<8x1xi32>
    %10 = arith.select %4, %8, %9 : vector<8x1xi1>, vector<8x1xi32>
    %11 = tpu.iota {dimensions = array<i32: 1>} : vector<8x168xi32>
    %12 = vector.broadcast %1 : vector<8x1xi32> to vector<8x168xi32>
    %13 = arith.cmpi eq, %11, %12 : vector<8x168xi32>
    %c100_i32 = arith.constant 100 : i32
    %14 = vector.broadcast %c100_i32 : i32 to vector<8x1xi32>
    %15 = arith.addi %14, %10 : vector<8x1xi32>
    %16 = vector.broadcast %15 : vector<8x1xi32> to vector<8x168xi32>
    %17 = arith.cmpi eq, %11, %16 : vector<8x168xi32>
    %18 = arith.ori %13, %17 : vector<8x168xi1>
    %c164_i32 = arith.constant 164 : i32
    %19 = vector.broadcast %c164_i32 : i32 to vector<8x168xi32>
    %20 = arith.cmpi eq, %11, %19 : vector<8x168xi32>
    %21 = arith.ori %18, %20 : vector<8x168xi1>
    %22 = arith.extui %21 : vector<8x168xi1> to vector<8x168xi32>
    %23 = arith.sitofp %22 : vector<8x168xi32> to vector<8x168xf32>
    %c0_3 = arith.constant 0 : index
    %c0_4 = arith.constant 0 : index
    %24 = vector.load %arg2[%c0_3, %c0_4] : memref<168x32xf32, #tpu.memory_space<vmem>>, vector<168x32xf32>
    %cst = arith.constant dense<0.000000e+00> : vector<8x32xf32>
    %25 = tpu.matmul %23, %24, %cst {dimension_numbers = #tpu.dot_dimension_numbers<[1], [0], [0], [1], [0, 0, 1, 1], [], []>} : vector<8x168xf32>, vector<168x32xf32>, vector<8x32xf32> -> vector<8x32xf32>
    %c165 = arith.constant 165 : index
    %c0_5 = arith.constant 0 : index
    %26 = vector.load %arg2[%c165, %c0_5] : memref<168x32xf32, #tpu.memory_space<vmem>>, vector<1x32xf32>
    %c166 = arith.constant 166 : index
    %c0_6 = arith.constant 0 : index
    %27 = vector.load %arg2[%c166, %c0_6] : memref<168x32xf32, #tpu.memory_space<vmem>>, vector<1x32xf32>
    %cst_7 = arith.constant dense<0.000000e+00> : vector<8xf32>
    %28 = vector.multi_reduction <add>, %25, %cst_7 [1] : vector<8x32xf32> to vector<8xf32>
    %29 = vector.shape_cast %28 : vector<8xf32> to vector<8x1xf32>
    %cst_8 = arith.constant 3.200000e+01 : f32
    %30 = vector.broadcast %cst_8 : f32 to vector<8x1xf32>
    %31 = arith.divf %29, %30 : vector<8x1xf32>
    %32 = vector.broadcast %31 : vector<8x1xf32> to vector<8x32xf32>
    %33 = arith.subf %25, %32 : vector<8x32xf32>
    %34 = vector.broadcast %31 : vector<8x1xf32> to vector<8x32xf32>
    %35 = arith.subf %25, %34 : vector<8x32xf32>
    %36 = arith.mulf %33, %35 : vector<8x32xf32>
    %cst_9 = arith.constant dense<0.000000e+00> : vector<8xf32>
    %37 = vector.multi_reduction <add>, %36, %cst_9 [1] : vector<8x32xf32> to vector<8xf32>
    %38 = vector.shape_cast %37 : vector<8xf32> to vector<8x1xf32>
    %cst_10 = arith.constant 3.200000e+01 : f32
    %39 = vector.broadcast %cst_10 : f32 to vector<8x1xf32>
    %40 = arith.divf %38, %39 : vector<8x1xf32>
    %41 = vector.broadcast %31 : vector<8x1xf32> to vector<8x32xf32>
    %42 = arith.subf %25, %41 : vector<8x32xf32>
    %cst_11 = arith.constant 9.99999974E-6 : f32
    %43 = vector.broadcast %cst_11 : f32 to vector<8x1xf32>
    %44 = arith.addf %40, %43 : vector<8x1xf32>
    %45 = math.rsqrt %44 : vector<8x1xf32>
    %46 = vector.broadcast %45 : vector<8x1xf32> to vector<8x32xf32>
    %47 = arith.mulf %42, %46 : vector<8x32xf32>
    %48 = vector.broadcast %26 : vector<1x32xf32> to vector<8x32xf32>
    %49 = arith.mulf %47, %48 : vector<8x32xf32>
    %50 = vector.broadcast %27 : vector<1x32xf32> to vector<8x32xf32>
    %51 = arith.addf %49, %50 : vector<8x32xf32>
    %52 = tpu.iota {dimensions = array<i32: 1>} : vector<1x8xi32>
    %53 = vector.extract_strided_slice %2 {offsets = [0, 0], sizes = [1, 1], strides = [1, 1]} : vector<8x1xi32> to vector<1x1xi32>
    %54 = vector.broadcast %53 : vector<1x1xi32> to vector<1x8xi32>
    %55 = arith.cmpi slt, %52, %54 : vector<1x8xi32>
    %cst_12 = arith.constant 0.000000e+00 : f32
    %cst_13 = arith.constant -1.000000e+04 : f32
    %56 = vector.broadcast %cst_12 : f32 to vector<1x8xf32>
    %57 = vector.broadcast %cst_13 : f32 to vector<1x8xf32>
    %58 = arith.select %55, %56, %57 : vector<1x8xi1>, vector<1x8xf32>
    %c0_14 = arith.constant 0 : index
    %c0_15 = arith.constant 0 : index
    %c0_16 = arith.constant 0 : index
    %59 = vector.load %arg7[%c0_14, %c0_15, %c0_16] : memref<2x8x128xf32, #tpu.memory_space<vmem>>, vector<1x8x128xf32>
    %60 = vector.shape_cast %59 : vector<1x8x128xf32> to vector<8x128xf32>
    %c0_17 = arith.constant 0 : index
    %c0_18 = arith.constant 0 : index
    %c0_19 = arith.constant 0 : index
    %61 = vector.load %arg3[%c0_17, %c0_18, %c0_19] : memref<2x32x96xf32, #tpu.memory_space<vmem>>, vector<1x32x96xf32>
    %62 = vector.shape_cast %61 : vector<1x32x96xf32> to vector<32x96xf32>
    %cst_20 = arith.constant dense<0.000000e+00> : vector<8x96xf32>
    %63 = tpu.matmul %51, %62, %cst_20 {dimension_numbers = #tpu.dot_dimension_numbers<[1], [0], [0], [1], [0, 0, 1, 1], [], []>} : vector<8x32xf32>, vector<32x96xf32>, vector<8x96xf32> -> vector<8x96xf32>
    %64 = vector.extract_strided_slice %60 {offsets = [0, 0], sizes = [1, 96], strides = [1, 1]} : vector<8x128xf32> to vector<1x96xf32>
    %65 = vector.broadcast %64 : vector<1x96xf32> to vector<8x96xf32>
    %66 = arith.addf %63, %65 : vector<8x96xf32>
    %67 = vector.extract_strided_slice %66 {offsets = [0, 0], sizes = [8, 16], strides = [1, 1]} : vector<8x96xf32> to vector<8x16xf32>
    %68 = vector.extract_strided_slice %66 {offsets = [0, 32], sizes = [8, 16], strides = [1, 1]} : vector<8x96xf32> to vector<8x16xf32>
    %69 = vector.extract_strided_slice %66 {offsets = [0, 64], sizes = [8, 16], strides = [1, 1]} : vector<8x96xf32> to vector<8x16xf32>
    "tpu.trace_start"() <{level = 10 : i32, message = "qd,kd->qk"}> : () -> ()
    %cst_21 = arith.constant dense<0.000000e+00> : vector<8x8xf32>
    %70 = tpu.matmul %67, %68, %cst_21 {dimension_numbers = #tpu.dot_dimension_numbers<[1], [1], [0], [0], [0, 0, 1, 0], [], []>} : vector<8x16xf32>, vector<8x16xf32>, vector<8x8xf32> -> vector<8x8xf32>
    "tpu.trace_stop"() : () -> ()
    %71 = vector.broadcast %58 : vector<1x8xf32> to vector<8x8xf32>
    %72 = arith.addf %70, %71 : vector<8x8xf32>
    %cst_22 = arith.constant dense<0xFF800000> : vector<8xf32>
    %73 = vector.multi_reduction <maximumf>, %72, %cst_22 [1] : vector<8x8xf32> to vector<8xf32>
    %74 = vector.shape_cast %73 : vector<8xf32> to vector<8x1xf32>
    %75 = vector.broadcast %74 : vector<8x1xf32> to vector<8x8xf32>
    %76 = arith.subf %72, %75 : vector<8x8xf32>
    %77 = math.exp %76 : vector<8x8xf32>
    %cst_23 = arith.constant dense<0.000000e+00> : vector<8xf32>
    %78 = vector.multi_reduction <add>, %77, %cst_23 [1] : vector<8x8xf32> to vector<8xf32>
    %79 = vector.shape_cast %78 : vector<8xf32> to vector<8x1xf32>
    %80 = vector.broadcast %79 : vector<8x1xf32> to vector<8x8xf32>
    %81 = arith.divf %77, %80 : vector<8x8xf32>
    %cst_24 = arith.constant dense<0.000000e+00> : vector<8x16xf32>
    %82 = tpu.matmul %81, %69, %cst_24 {dimension_numbers = #tpu.dot_dimension_numbers<[1], [0], [0], [1], [0, 0, 1, 1], [], []>} : vector<8x8xf32>, vector<8x16xf32>, vector<8x16xf32> -> vector<8x16xf32>
    %83 = vector.extract_strided_slice %66 {offsets = [0, 16], sizes = [8, 16], strides = [1, 1]} : vector<8x96xf32> to vector<8x16xf32>
    %84 = vector.extract_strided_slice %66 {offsets = [0, 48], sizes = [8, 16], strides = [1, 1]} : vector<8x96xf32> to vector<8x16xf32>
    %85 = vector.extract_strided_slice %66 {offsets = [0, 80], sizes = [8, 16], strides = [1, 1]} : vector<8x96xf32> to vector<8x16xf32>
    "tpu.trace_start"() <{level = 10 : i32, message = "qd,kd->qk"}> : () -> ()
    %cst_25 = arith.constant dense<0.000000e+00> : vector<8x8xf32>
    %86 = tpu.matmul %83, %84, %cst_25 {dimension_numbers = #tpu.dot_dimension_numbers<[1], [1], [0], [0], [0, 0, 1, 0], [], []>} : vector<8x16xf32>, vector<8x16xf32>, vector<8x8xf32> -> vector<8x8xf32>
    "tpu.trace_stop"() : () -> ()
    %87 = vector.broadcast %58 : vector<1x8xf32> to vector<8x8xf32>
    %88 = arith.addf %86, %87 : vector<8x8xf32>
    %cst_26 = arith.constant dense<0xFF800000> : vector<8xf32>
    %89 = vector.multi_reduction <maximumf>, %88, %cst_26 [1] : vector<8x8xf32> to vector<8xf32>
    %90 = vector.shape_cast %89 : vector<8xf32> to vector<8x1xf32>
    %91 = vector.broadcast %90 : vector<8x1xf32> to vector<8x8xf32>
    %92 = arith.subf %88, %91 : vector<8x8xf32>
    %93 = math.exp %92 : vector<8x8xf32>
    %cst_27 = arith.constant dense<0.000000e+00> : vector<8xf32>
    %94 = vector.multi_reduction <add>, %93, %cst_27 [1] : vector<8x8xf32> to vector<8xf32>
    %95 = vector.shape_cast %94 : vector<8xf32> to vector<8x1xf32>
    %96 = vector.broadcast %95 : vector<8x1xf32> to vector<8x8xf32>
    %97 = arith.divf %93, %96 : vector<8x8xf32>
    %cst_28 = arith.constant dense<0.000000e+00> : vector<8x16xf32>
    %98 = tpu.matmul %97, %85, %cst_28 {dimension_numbers = #tpu.dot_dimension_numbers<[1], [0], [0], [1], [0, 0, 1, 1], [], []>} : vector<8x8xf32>, vector<8x16xf32>, vector<8x16xf32> -> vector<8x16xf32>
    %99 = tpu.concatenate %82, %98 in 1 : vector<8x16xf32>, vector<8x16xf32> -> vector<8x32xf32>
    %c0_29 = arith.constant 0 : index
    %c0_30 = arith.constant 0 : index
    %c0_31 = arith.constant 0 : index
    %100 = vector.load %arg4[%c0_29, %c0_30, %c0_31] : memref<2x32x32xf32, #tpu.memory_space<vmem>>, vector<1x32x32xf32>
    %101 = vector.shape_cast %100 : vector<1x32x32xf32> to vector<32x32xf32>
    %cst_32 = arith.constant dense<0.000000e+00> : vector<8x32xf32>
    %102 = tpu.matmul %99, %101, %cst_32 {dimension_numbers = #tpu.dot_dimension_numbers<[1], [0], [0], [1], [0, 0, 1, 1], [], []>} : vector<8x32xf32>, vector<32x32xf32>, vector<8x32xf32> -> vector<8x32xf32>
    %103 = vector.extract_strided_slice %60 {offsets = [1, 0], sizes = [1, 32], strides = [1, 1]} : vector<8x128xf32> to vector<1x32xf32>
    %104 = vector.broadcast %103 : vector<1x32xf32> to vector<8x32xf32>
    %105 = arith.addf %102, %104 : vector<8x32xf32>
    %106 = arith.addf %105, %51 : vector<8x32xf32>
    %107 = vector.extract_strided_slice %60 {offsets = [4, 0], sizes = [1, 32], strides = [1, 1]} : vector<8x128xf32> to vector<1x32xf32>
    %108 = vector.extract_strided_slice %60 {offsets = [5, 0], sizes = [1, 32], strides = [1, 1]} : vector<8x128xf32> to vector<1x32xf32>
    %cst_33 = arith.constant dense<0.000000e+00> : vector<8xf32>
    %109 = vector.multi_reduction <add>, %106, %cst_33 [1] : vector<8x32xf32> to vector<8xf32>
    %110 = vector.shape_cast %109 : vector<8xf32> to vector<8x1xf32>
    %cst_34 = arith.constant 3.200000e+01 : f32
    %111 = vector.broadcast %cst_34 : f32 to vector<8x1xf32>
    %112 = arith.divf %110, %111 : vector<8x1xf32>
    %113 = vector.broadcast %112 : vector<8x1xf32> to vector<8x32xf32>
    %114 = arith.subf %106, %113 : vector<8x32xf32>
    %115 = vector.broadcast %112 : vector<8x1xf32> to vector<8x32xf32>
    %116 = arith.subf %106, %115 : vector<8x32xf32>
    %117 = arith.mulf %114, %116 : vector<8x32xf32>
    %cst_35 = arith.constant dense<0.000000e+00> : vector<8xf32>
    %118 = vector.multi_reduction <add>, %117, %cst_35 [1] : vector<8x32xf32> to vector<8xf32>
    %119 = vector.shape_cast %118 : vector<8xf32> to vector<8x1xf32>
    %cst_36 = arith.constant 3.200000e+01 : f32
    %120 = vector.broadcast %cst_36 : f32 to vector<8x1xf32>
    %121 = arith.divf %119, %120 : vector<8x1xf32>
    %122 = vector.broadcast %112 : vector<8x1xf32> to vector<8x32xf32>
    %123 = arith.subf %106, %122 : vector<8x32xf32>
    %cst_37 = arith.constant 9.99999974E-6 : f32
    %124 = vector.broadcast %cst_37 : f32 to vector<8x1xf32>
    %125 = arith.addf %121, %124 : vector<8x1xf32>
    %126 = math.rsqrt %125 : vector<8x1xf32>
    %127 = vector.broadcast %126 : vector<8x1xf32> to vector<8x32xf32>
    %128 = arith.mulf %123, %127 : vector<8x32xf32>
    %129 = vector.broadcast %107 : vector<1x32xf32> to vector<8x32xf32>
    %130 = arith.mulf %128, %129 : vector<8x32xf32>
    %131 = vector.broadcast %108 : vector<1x32xf32> to vector<8x32xf32>
    %132 = arith.addf %130, %131 : vector<8x32xf32>
    %c0_38 = arith.constant 0 : index
    %c0_39 = arith.constant 0 : index
    %c0_40 = arith.constant 0 : index
    %133 = vector.load %arg5[%c0_38, %c0_39, %c0_40] : memref<2x32x64xf32, #tpu.memory_space<vmem>>, vector<1x32x64xf32>
    %134 = vector.shape_cast %133 : vector<1x32x64xf32> to vector<32x64xf32>
    %cst_41 = arith.constant dense<0.000000e+00> : vector<8x64xf32>
    %135 = tpu.matmul %132, %134, %cst_41 {dimension_numbers = #tpu.dot_dimension_numbers<[1], [0], [0], [1], [0, 0, 1, 1], [], []>} : vector<8x32xf32>, vector<32x64xf32>, vector<8x64xf32> -> vector<8x64xf32>
    %136 = vector.extract_strided_slice %60 {offsets = [2, 0], sizes = [1, 64], strides = [1, 1]} : vector<8x128xf32> to vector<1x64xf32>
    %137 = vector.broadcast %136 : vector<1x64xf32> to vector<8x64xf32>
    %138 = arith.addf %135, %137 : vector<8x64xf32>
    %cst_42 = arith.constant 0.636619746 : f32
    %139 = math.sqrt %cst_42 : f32
    %cst_43 = arith.constant 5.000000e-01 : f32
    %140 = vector.broadcast %cst_43 : f32 to vector<8x64xf32>
    %141 = arith.mulf %140, %138 : vector<8x64xf32>
    %cst_44 = arith.constant 4.471500e-02 : f32
    %142 = vector.broadcast %cst_44 : f32 to vector<8x64xf32>
    %143 = arith.mulf %142, %138 : vector<8x64xf32>
    %144 = arith.mulf %143, %138 : vector<8x64xf32>
    %145 = arith.mulf %144, %138 : vector<8x64xf32>
    %146 = arith.addf %138, %145 : vector<8x64xf32>
    %147 = vector.broadcast %139 : f32 to vector<8x64xf32>
    %148 = arith.mulf %147, %146 : vector<8x64xf32>
    %149 = math.tanh %148 : vector<8x64xf32>
    %cst_45 = arith.constant 1.000000e+00 : f32
    %150 = vector.broadcast %cst_45 : f32 to vector<8x64xf32>
    %151 = arith.addf %150, %149 : vector<8x64xf32>
    %152 = arith.mulf %141, %151 : vector<8x64xf32>
    %c0_46 = arith.constant 0 : index
    %c0_47 = arith.constant 0 : index
    %c0_48 = arith.constant 0 : index
    %153 = vector.load %arg6[%c0_46, %c0_47, %c0_48] : memref<2x64x32xf32, #tpu.memory_space<vmem>>, vector<1x64x32xf32>
    %154 = vector.shape_cast %153 : vector<1x64x32xf32> to vector<64x32xf32>
    %cst_49 = arith.constant dense<0.000000e+00> : vector<8x32xf32>
    %155 = tpu.matmul %152, %154, %cst_49 {dimension_numbers = #tpu.dot_dimension_numbers<[1], [0], [0], [1], [0, 0, 1, 1], [], []>} : vector<8x64xf32>, vector<64x32xf32>, vector<8x32xf32> -> vector<8x32xf32>
    %156 = vector.extract_strided_slice %60 {offsets = [3, 0], sizes = [1, 32], strides = [1, 1]} : vector<8x128xf32> to vector<1x32xf32>
    %157 = vector.broadcast %156 : vector<1x32xf32> to vector<8x32xf32>
    %158 = arith.addf %155, %157 : vector<8x32xf32>
    %159 = arith.addf %158, %132 : vector<8x32xf32>
    %160 = vector.extract_strided_slice %60 {offsets = [6, 0], sizes = [1, 32], strides = [1, 1]} : vector<8x128xf32> to vector<1x32xf32>
    %161 = vector.extract_strided_slice %60 {offsets = [7, 0], sizes = [1, 32], strides = [1, 1]} : vector<8x128xf32> to vector<1x32xf32>
    %cst_50 = arith.constant dense<0.000000e+00> : vector<8xf32>
    %162 = vector.multi_reduction <add>, %159, %cst_50 [1] : vector<8x32xf32> to vector<8xf32>
    %163 = vector.shape_cast %162 : vector<8xf32> to vector<8x1xf32>
    %cst_51 = arith.constant 3.200000e+01 : f32
    %164 = vector.broadcast %cst_51 : f32 to vector<8x1xf32>
    %165 = arith.divf %163, %164 : vector<8x1xf32>
    %166 = vector.broadcast %165 : vector<8x1xf32> to vector<8x32xf32>
    %167 = arith.subf %159, %166 : vector<8x32xf32>
    %168 = vector.broadcast %165 : vector<8x1xf32> to vector<8x32xf32>
    %169 = arith.subf %159, %168 : vector<8x32xf32>
    %170 = arith.mulf %167, %169 : vector<8x32xf32>
    %cst_52 = arith.constant dense<0.000000e+00> : vector<8xf32>
    %171 = vector.multi_reduction <add>, %170, %cst_52 [1] : vector<8x32xf32> to vector<8xf32>
    %172 = vector.shape_cast %171 : vector<8xf32> to vector<8x1xf32>
    %cst_53 = arith.constant 3.200000e+01 : f32
    %173 = vector.broadcast %cst_53 : f32 to vector<8x1xf32>
    %174 = arith.divf %172, %173 : vector<8x1xf32>
    %175 = vector.broadcast %165 : vector<8x1xf32> to vector<8x32xf32>
    %176 = arith.subf %159, %175 : vector<8x32xf32>
    %cst_54 = arith.constant 9.99999974E-6 : f32
    %177 = vector.broadcast %cst_54 : f32 to vector<8x1xf32>
    %178 = arith.addf %174, %177 : vector<8x1xf32>
    %179 = math.rsqrt %178 : vector<8x1xf32>
    %180 = vector.broadcast %179 : vector<8x1xf32> to vector<8x32xf32>
    %181 = arith.mulf %176, %180 : vector<8x32xf32>
    %182 = vector.broadcast %160 : vector<1x32xf32> to vector<8x32xf32>
    %183 = arith.mulf %181, %182 : vector<8x32xf32>
    %184 = vector.broadcast %161 : vector<1x32xf32> to vector<8x32xf32>
    %185 = arith.addf %183, %184 : vector<8x32xf32>
    %c1 = arith.constant 1 : index
    %c0_55 = arith.constant 0 : index
    %c0_56 = arith.constant 0 : index
    %186 = vector.load %arg7[%c1, %c0_55, %c0_56] : memref<2x8x128xf32, #tpu.memory_space<vmem>>, vector<1x8x128xf32>
    %187 = vector.shape_cast %186 : vector<1x8x128xf32> to vector<8x128xf32>
    %c1_57 = arith.constant 1 : index
    %c0_58 = arith.constant 0 : index
    %c0_59 = arith.constant 0 : index
    %188 = vector.load %arg3[%c1_57, %c0_58, %c0_59] : memref<2x32x96xf32, #tpu.memory_space<vmem>>, vector<1x32x96xf32>
    %189 = vector.shape_cast %188 : vector<1x32x96xf32> to vector<32x96xf32>
    %cst_60 = arith.constant dense<0.000000e+00> : vector<8x96xf32>
    %190 = tpu.matmul %185, %189, %cst_60 {dimension_numbers = #tpu.dot_dimension_numbers<[1], [0], [0], [1], [0, 0, 1, 1], [], []>} : vector<8x32xf32>, vector<32x96xf32>, vector<8x96xf32> -> vector<8x96xf32>
    %191 = vector.extract_strided_slice %187 {offsets = [0, 0], sizes = [1, 96], strides = [1, 1]} : vector<8x128xf32> to vector<1x96xf32>
    %192 = vector.broadcast %191 : vector<1x96xf32> to vector<8x96xf32>
    %193 = arith.addf %190, %192 : vector<8x96xf32>
    %194 = vector.extract_strided_slice %193 {offsets = [0, 0], sizes = [8, 16], strides = [1, 1]} : vector<8x96xf32> to vector<8x16xf32>
    %195 = vector.extract_strided_slice %193 {offsets = [0, 32], sizes = [8, 16], strides = [1, 1]} : vector<8x96xf32> to vector<8x16xf32>
    %196 = vector.extract_strided_slice %193 {offsets = [0, 64], sizes = [8, 16], strides = [1, 1]} : vector<8x96xf32> to vector<8x16xf32>
    "tpu.trace_start"() <{level = 10 : i32, message = "qd,kd->qk"}> : () -> ()
    %cst_61 = arith.constant dense<0.000000e+00> : vector<8x8xf32>
    %197 = tpu.matmul %194, %195, %cst_61 {dimension_numbers = #tpu.dot_dimension_numbers<[1], [1], [0], [0], [0, 0, 1, 0], [], []>} : vector<8x16xf32>, vector<8x16xf32>, vector<8x8xf32> -> vector<8x8xf32>
    "tpu.trace_stop"() : () -> ()
    %198 = vector.broadcast %58 : vector<1x8xf32> to vector<8x8xf32>
    %199 = arith.addf %197, %198 : vector<8x8xf32>
    %cst_62 = arith.constant dense<0xFF800000> : vector<8xf32>
    %200 = vector.multi_reduction <maximumf>, %199, %cst_62 [1] : vector<8x8xf32> to vector<8xf32>
    %201 = vector.shape_cast %200 : vector<8xf32> to vector<8x1xf32>
    %202 = vector.broadcast %201 : vector<8x1xf32> to vector<8x8xf32>
    %203 = arith.subf %199, %202 : vector<8x8xf32>
    %204 = math.exp %203 : vector<8x8xf32>
    %cst_63 = arith.constant dense<0.000000e+00> : vector<8xf32>
    %205 = vector.multi_reduction <add>, %204, %cst_63 [1] : vector<8x8xf32> to vector<8xf32>
    %206 = vector.shape_cast %205 : vector<8xf32> to vector<8x1xf32>
    %207 = vector.broadcast %206 : vector<8x1xf32> to vector<8x8xf32>
    %208 = arith.divf %204, %207 : vector<8x8xf32>
    %cst_64 = arith.constant dense<0.000000e+00> : vector<8x16xf32>
    %209 = tpu.matmul %208, %196, %cst_64 {dimension_numbers = #tpu.dot_dimension_numbers<[1], [0], [0], [1], [0, 0, 1, 1], [], []>} : vector<8x8xf32>, vector<8x16xf32>, vector<8x16xf32> -> vector<8x16xf32>
    %210 = vector.extract_strided_slice %193 {offsets = [0, 16], sizes = [8, 16], strides = [1, 1]} : vector<8x96xf32> to vector<8x16xf32>
    %211 = vector.extract_strided_slice %193 {offsets = [0, 48], sizes = [8, 16], strides = [1, 1]} : vector<8x96xf32> to vector<8x16xf32>
    %212 = vector.extract_strided_slice %193 {offsets = [0, 80], sizes = [8, 16], strides = [1, 1]} : vector<8x96xf32> to vector<8x16xf32>
    "tpu.trace_start"() <{level = 10 : i32, message = "qd,kd->qk"}> : () -> ()
    %cst_65 = arith.constant dense<0.000000e+00> : vector<8x8xf32>
    %213 = tpu.matmul %210, %211, %cst_65 {dimension_numbers = #tpu.dot_dimension_numbers<[1], [1], [0], [0], [0, 0, 1, 0], [], []>} : vector<8x16xf32>, vector<8x16xf32>, vector<8x8xf32> -> vector<8x8xf32>
    "tpu.trace_stop"() : () -> ()
    %214 = vector.broadcast %58 : vector<1x8xf32> to vector<8x8xf32>
    %215 = arith.addf %213, %214 : vector<8x8xf32>
    %cst_66 = arith.constant dense<0xFF800000> : vector<8xf32>
    %216 = vector.multi_reduction <maximumf>, %215, %cst_66 [1] : vector<8x8xf32> to vector<8xf32>
    %217 = vector.shape_cast %216 : vector<8xf32> to vector<8x1xf32>
    %218 = vector.broadcast %217 : vector<8x1xf32> to vector<8x8xf32>
    %219 = arith.subf %215, %218 : vector<8x8xf32>
    %220 = math.exp %219 : vector<8x8xf32>
    %cst_67 = arith.constant dense<0.000000e+00> : vector<8xf32>
    %221 = vector.multi_reduction <add>, %220, %cst_67 [1] : vector<8x8xf32> to vector<8xf32>
    %222 = vector.shape_cast %221 : vector<8xf32> to vector<8x1xf32>
    %223 = vector.broadcast %222 : vector<8x1xf32> to vector<8x8xf32>
    %224 = arith.divf %220, %223 : vector<8x8xf32>
    %cst_68 = arith.constant dense<0.000000e+00> : vector<8x16xf32>
    %225 = tpu.matmul %224, %212, %cst_68 {dimension_numbers = #tpu.dot_dimension_numbers<[1], [0], [0], [1], [0, 0, 1, 1], [], []>} : vector<8x8xf32>, vector<8x16xf32>, vector<8x16xf32> -> vector<8x16xf32>
    %226 = tpu.concatenate %209, %225 in 1 : vector<8x16xf32>, vector<8x16xf32> -> vector<8x32xf32>
    %c1_69 = arith.constant 1 : index
    %c0_70 = arith.constant 0 : index
    %c0_71 = arith.constant 0 : index
    %227 = vector.load %arg4[%c1_69, %c0_70, %c0_71] : memref<2x32x32xf32, #tpu.memory_space<vmem>>, vector<1x32x32xf32>
    %228 = vector.shape_cast %227 : vector<1x32x32xf32> to vector<32x32xf32>
    %cst_72 = arith.constant dense<0.000000e+00> : vector<8x32xf32>
    %229 = tpu.matmul %226, %228, %cst_72 {dimension_numbers = #tpu.dot_dimension_numbers<[1], [0], [0], [1], [0, 0, 1, 1], [], []>} : vector<8x32xf32>, vector<32x32xf32>, vector<8x32xf32> -> vector<8x32xf32>
    %230 = vector.extract_strided_slice %187 {offsets = [1, 0], sizes = [1, 32], strides = [1, 1]} : vector<8x128xf32> to vector<1x32xf32>
    %231 = vector.broadcast %230 : vector<1x32xf32> to vector<8x32xf32>
    %232 = arith.addf %229, %231 : vector<8x32xf32>
    %233 = arith.addf %232, %185 : vector<8x32xf32>
    %234 = vector.extract_strided_slice %187 {offsets = [4, 0], sizes = [1, 32], strides = [1, 1]} : vector<8x128xf32> to vector<1x32xf32>
    %235 = vector.extract_strided_slice %187 {offsets = [5, 0], sizes = [1, 32], strides = [1, 1]} : vector<8x128xf32> to vector<1x32xf32>
    %cst_73 = arith.constant dense<0.000000e+00> : vector<8xf32>
    %236 = vector.multi_reduction <add>, %233, %cst_73 [1] : vector<8x32xf32> to vector<8xf32>
    %237 = vector.shape_cast %236 : vector<8xf32> to vector<8x1xf32>
    %cst_74 = arith.constant 3.200000e+01 : f32
    %238 = vector.broadcast %cst_74 : f32 to vector<8x1xf32>
    %239 = arith.divf %237, %238 : vector<8x1xf32>
    %240 = vector.broadcast %239 : vector<8x1xf32> to vector<8x32xf32>
    %241 = arith.subf %233, %240 : vector<8x32xf32>
    %242 = vector.broadcast %239 : vector<8x1xf32> to vector<8x32xf32>
    %243 = arith.subf %233, %242 : vector<8x32xf32>
    %244 = arith.mulf %241, %243 : vector<8x32xf32>
    %cst_75 = arith.constant dense<0.000000e+00> : vector<8xf32>
    %245 = vector.multi_reduction <add>, %244, %cst_75 [1] : vector<8x32xf32> to vector<8xf32>
    %246 = vector.shape_cast %245 : vector<8xf32> to vector<8x1xf32>
    %cst_76 = arith.constant 3.200000e+01 : f32
    %247 = vector.broadcast %cst_76 : f32 to vector<8x1xf32>
    %248 = arith.divf %246, %247 : vector<8x1xf32>
    %249 = vector.broadcast %239 : vector<8x1xf32> to vector<8x32xf32>
    %250 = arith.subf %233, %249 : vector<8x32xf32>
    %cst_77 = arith.constant 9.99999974E-6 : f32
    %251 = vector.broadcast %cst_77 : f32 to vector<8x1xf32>
    %252 = arith.addf %248, %251 : vector<8x1xf32>
    %253 = math.rsqrt %252 : vector<8x1xf32>
    %254 = vector.broadcast %253 : vector<8x1xf32> to vector<8x32xf32>
    %255 = arith.mulf %250, %254 : vector<8x32xf32>
    %256 = vector.broadcast %234 : vector<1x32xf32> to vector<8x32xf32>
    %257 = arith.mulf %255, %256 : vector<8x32xf32>
    %258 = vector.broadcast %235 : vector<1x32xf32> to vector<8x32xf32>
    %259 = arith.addf %257, %258 : vector<8x32xf32>
    %c1_78 = arith.constant 1 : index
    %c0_79 = arith.constant 0 : index
    %c0_80 = arith.constant 0 : index
    %260 = vector.load %arg5[%c1_78, %c0_79, %c0_80] : memref<2x32x64xf32, #tpu.memory_space<vmem>>, vector<1x32x64xf32>
    %261 = vector.shape_cast %260 : vector<1x32x64xf32> to vector<32x64xf32>
    %cst_81 = arith.constant dense<0.000000e+00> : vector<8x64xf32>
    %262 = tpu.matmul %259, %261, %cst_81 {dimension_numbers = #tpu.dot_dimension_numbers<[1], [0], [0], [1], [0, 0, 1, 1], [], []>} : vector<8x32xf32>, vector<32x64xf32>, vector<8x64xf32> -> vector<8x64xf32>
    %263 = vector.extract_strided_slice %187 {offsets = [2, 0], sizes = [1, 64], strides = [1, 1]} : vector<8x128xf32> to vector<1x64xf32>
    %264 = vector.broadcast %263 : vector<1x64xf32> to vector<8x64xf32>
    %265 = arith.addf %262, %264 : vector<8x64xf32>
    %cst_82 = arith.constant 0.636619746 : f32
    %266 = math.sqrt %cst_82 : f32
    %cst_83 = arith.constant 5.000000e-01 : f32
    %267 = vector.broadcast %cst_83 : f32 to vector<8x64xf32>
    %268 = arith.mulf %267, %265 : vector<8x64xf32>
    %cst_84 = arith.constant 4.471500e-02 : f32
    %269 = vector.broadcast %cst_84 : f32 to vector<8x64xf32>
    %270 = arith.mulf %269, %265 : vector<8x64xf32>
    %271 = arith.mulf %270, %265 : vector<8x64xf32>
    %272 = arith.mulf %271, %265 : vector<8x64xf32>
    %273 = arith.addf %265, %272 : vector<8x64xf32>
    %274 = vector.broadcast %266 : f32 to vector<8x64xf32>
    %275 = arith.mulf %274, %273 : vector<8x64xf32>
    %276 = math.tanh %275 : vector<8x64xf32>
    %cst_85 = arith.constant 1.000000e+00 : f32
    %277 = vector.broadcast %cst_85 : f32 to vector<8x64xf32>
    %278 = arith.addf %277, %276 : vector<8x64xf32>
    %279 = arith.mulf %268, %278 : vector<8x64xf32>
    %c1_86 = arith.constant 1 : index
    %c0_87 = arith.constant 0 : index
    %c0_88 = arith.constant 0 : index
    %280 = vector.load %arg6[%c1_86, %c0_87, %c0_88] : memref<2x64x32xf32, #tpu.memory_space<vmem>>, vector<1x64x32xf32>
    %281 = vector.shape_cast %280 : vector<1x64x32xf32> to vector<64x32xf32>
    %cst_89 = arith.constant dense<0.000000e+00> : vector<8x32xf32>
    %282 = tpu.matmul %279, %281, %cst_89 {dimension_numbers = #tpu.dot_dimension_numbers<[1], [0], [0], [1], [0, 0, 1, 1], [], []>} : vector<8x64xf32>, vector<64x32xf32>, vector<8x32xf32> -> vector<8x32xf32>
    %283 = vector.extract_strided_slice %187 {offsets = [3, 0], sizes = [1, 32], strides = [1, 1]} : vector<8x128xf32> to vector<1x32xf32>
    %284 = vector.broadcast %283 : vector<1x32xf32> to vector<8x32xf32>
    %285 = arith.addf %282, %284 : vector<8x32xf32>
    %286 = arith.addf %285, %259 : vector<8x32xf32>
    %287 = vector.extract_strided_slice %187 {offsets = [6, 0], sizes = [1, 32], strides = [1, 1]} : vector<8x128xf32> to vector<1x32xf32>
    %288 = vector.extract_strided_slice %187 {offsets = [7, 0], sizes = [1, 32], strides = [1, 1]} : vector<8x128xf32> to vector<1x32xf32>
    %cst_90 = arith.constant dense<0.000000e+00> : vector<8xf32>
    %289 = vector.multi_reduction <add>, %286, %cst_90 [1] : vector<8x32xf32> to vector<8xf32>
    %290 = vector.shape_cast %289 : vector<8xf32> to vector<8x1xf32>
    %cst_91 = arith.constant 3.200000e+01 : f32
    %291 = vector.broadcast %cst_91 : f32 to vector<8x1xf32>
    %292 = arith.divf %290, %291 : vector<8x1xf32>
    %293 = vector.broadcast %292 : vector<8x1xf32> to vector<8x32xf32>
    %294 = arith.subf %286, %293 : vector<8x32xf32>
    %295 = vector.broadcast %292 : vector<8x1xf32> to vector<8x32xf32>
    %296 = arith.subf %286, %295 : vector<8x32xf32>
    %297 = arith.mulf %294, %296 : vector<8x32xf32>
    %cst_92 = arith.constant dense<0.000000e+00> : vector<8xf32>
    %298 = vector.multi_reduction <add>, %297, %cst_92 [1] : vector<8x32xf32> to vector<8xf32>
    %299 = vector.shape_cast %298 : vector<8xf32> to vector<8x1xf32>
    %cst_93 = arith.constant 3.200000e+01 : f32
    %300 = vector.broadcast %cst_93 : f32 to vector<8x1xf32>
    %301 = arith.divf %299, %300 : vector<8x1xf32>
    %302 = vector.broadcast %292 : vector<8x1xf32> to vector<8x32xf32>
    %303 = arith.subf %286, %302 : vector<8x32xf32>
    %cst_94 = arith.constant 9.99999974E-6 : f32
    %304 = vector.broadcast %cst_94 : f32 to vector<8x1xf32>
    %305 = arith.addf %301, %304 : vector<8x1xf32>
    %306 = math.rsqrt %305 : vector<8x1xf32>
    %307 = vector.broadcast %306 : vector<8x1xf32> to vector<8x32xf32>
    %308 = arith.mulf %303, %307 : vector<8x32xf32>
    %309 = vector.broadcast %287 : vector<1x32xf32> to vector<8x32xf32>
    %310 = arith.mulf %308, %309 : vector<8x32xf32>
    %311 = vector.broadcast %288 : vector<1x32xf32> to vector<8x32xf32>
    %312 = arith.addf %310, %311 : vector<8x32xf32>
    %c0_95 = arith.constant 0 : index
    %c0_96 = arith.constant 0 : index
    %313 = vector.load %arg8[%c0_95, %c0_96] : memref<8x32xf32, #tpu.memory_space<vmem>>, vector<8x32xf32>
    tpu.vector_store %arg8[%c0_95, %c0_96], %312 {strides = array<i32>} : memref<8x32xf32, #tpu.memory_space<vmem>>, vector<8x32xf32>,
    return
  }
  func.func @transform_0(%arg0: i32) -> (i32, i32) {
    %c0_i32 = arith.constant 0 : i32
    %c0_i32_0 = arith.constant 0 : i32
    return %arg0, %c0_i32 : i32, i32
  }
  func.func @transform_1(%arg0: i32) -> (i32, i32) {
    %c0_i32 = arith.constant 0 : i32
    %c0_i32_0 = arith.constant 0 : i32
    %c0_i32_1 = arith.constant 0 : i32
    return %c0_i32, %c0_i32_0 : i32, i32
  }
  func.func @transform_2(%arg0: i32) -> (i32, i32, i32) {
    %c0_i32 = arith.constant 0 : i32
    %c0_i32_0 = arith.constant 0 : i32
    %c0_i32_1 = arith.constant 0 : i32
    %c0_i32_2 = arith.constant 0 : i32
    return %c0_i32, %c0_i32_0, %c0_i32_1 : i32, i32, i32
  }
  func.func @transform_3(%arg0: i32) -> (i32, i32, i32) {
    %c0_i32 = arith.constant 0 : i32
    %c0_i32_0 = arith.constant 0 : i32
    %c0_i32_1 = arith.constant 0 : i32
    %c0_i32_2 = arith.constant 0 : i32
    return %c0_i32, %c0_i32_0, %c0_i32_1 : i32, i32, i32
  }
  func.func @transform_4(%arg0: i32) -> (i32, i32, i32) {
    %c0_i32 = arith.constant 0 : i32
    %c0_i32_0 = arith.constant 0 : i32
    %c0_i32_1 = arith.constant 0 : i32
    %c0_i32_2 = arith.constant 0 : i32
    return %c0_i32, %c0_i32_0, %c0_i32_1 : i32, i32, i32
  }
  func.func @transform_5(%arg0: i32) -> (i32, i32, i32) {
    %c0_i32 = arith.constant 0 : i32
    %c0_i32_0 = arith.constant 0 : i32
    %c0_i32_1 = arith.constant 0 : i32
    %c0_i32_2 = arith.constant 0 : i32
    return %c0_i32, %c0_i32_0, %c0_i32_1 : i32, i32, i32
  }
  func.func @transform_6(%arg0: i32) -> (i32, i32, i32) {
    %c0_i32 = arith.constant 0 : i32
    %c0_i32_0 = arith.constant 0 : i32
    %c0_i32_1 = arith.constant 0 : i32
    %c0_i32_2 = arith.constant 0 : i32
    return %c0_i32, %c0_i32_0, %c0_i32_1 : i32, i32, i32
  }
  func.func @transform_7(%arg0: i32) -> (i32, i32) {
    %c0_i32 = arith.constant 0 : i32
    %c0_i32_0 = arith.constant 0 : i32
    return %arg0, %c0_i32 : i32, i32
  }
}

</mosaic_0001>

<llo_original>
// kernel: roberta_embedding_forward.1
$region0: #{roberta_embedding_forward.1}
  #allocation0 [shape = 'u32[]', space=smem, size = 0x4, offset = 0x4, fixed_abs, tag = 'smem constant byte address 0x4 - core index']
  #allocation1 [shape = 'u32[144,128]{1,0:T(1,128)}', space=vmem, size = 0x12000, scoped, tag = 'internal scratch']
  %s0 = inlined_call_operand.vmem [shape: s32[16,2], index: 0, kind: input, shape index: {}]
  %s1 = inlined_call_operand.vmem [shape: f32[168,32], index: 1, kind: input, shape index: {}]
  %s2 = inlined_call_operand.vmem [shape: f32[2,32,96], index: 2, kind: input, shape index: {}]
  %s3 = inlined_call_operand.vmem [shape: f32[2,32,32], index: 3, kind: input, shape index: {}]
  %s4 = inlined_call_operand.vmem [shape: f32[2,32,64], index: 4, kind: input, shape index: {}]
  %s5 = inlined_call_operand.vmem [shape: f32[2,64,32], index: 5, kind: input, shape index: {}]
  %s6 = inlined_call_operand.vmem [shape: f32[2,8,128], index: 6, kind: input, shape index: {}]
  %s7 = inlined_call_operand.hbm [shape: f32[16,32], index: 7, kind: output, shape index: {}]
  %s8 = sld [smem:[#allocation0]]
  $region61: #{roberta_embedding_forward.1} parent=0
    _
  %s10 = ssub.s32 1, %s8
  %s11 = scalar_select 0, %s10, %s8
  $region1: #{roberta_embedding_forward.1} parent=0
    #allocation2 [shape = 'u8[8192]{0}', space=vmem, size = 0x2000, scoped, tag = 'output window, operand 0']
    #allocation3 [shape = 's32[2]{0}', space=sflag, size = 0x8, scoped, tag = 'scoped memory for roberta_embedding_forward.1']
    %12 = vsyncpa [#allocation3], 0
    %s13 = scalar_lea.sflag [#allocation3], 1
    %14 = vsyncpa %s13, 0
    loop: start=0, step=1, limit=4
    $region2: #{roberta_embedding_forward.1} parent=1 // loop_pre_header
      _
    $region3: #{roberta_embedding_forward.1} parent=1 // loop_header
      %s16 = sphi 0, %s20
      %p17 = scmp.ge.s32.totalorder %s16, 4
      %s26 = sphi 0, %s28
      %s29 = sphi 0, %s26
      %s30 = sphi 0, %s29
      %s46 = sphi 0, %s30
      %s50 = sphi 0, %s50
      %s52 = sphi 0, %s50
      %s53 = sphi 0, %s52
      %s67 = sphi 0, %s53
      %s71 = sphi 0, %s71
      %s73 = sphi 0, %s71
      %s74 = sphi 0, %s73
      %s88 = sphi 0, %s74
      %s92 = sphi 0, %s92
      %s94 = sphi 0, %s92
      %s95 = sphi 0, %s94
      %s109 = sphi 0, %s95
      %s113 = sphi 0, %s113
      %s115 = sphi 0, %s113
      %s116 = sphi 0, %s115
      %s130 = sphi 0, %s116
      %s134 = sphi 0, %s134
      %s136 = sphi 0, %s134
      %s137 = sphi 0, %s136
      %s151 = sphi 0, %s137
      %s155 = sphi 0, %s155
      %s157 = sphi 0, %s155
      %s158 = sphi 0, %s157
      %s172 = sphi 0, %s158
      %s178 = sphi 0, %s180
      %s181 = sphi 0, %s178
      %s182 = sphi 0, %s181
      %s198 = sphi 0, %s182
    $region4: #{roberta_embedding_forward.1} parent=1 // loop_header_branch
      %19 = sbr.rel (%p17) target = $region8
    $region5: #{roberta_embedding_forward.1} parent=1 // loop_body
      %s21 = ssub.s32 %s16, 1
      %s22 = ssub.s32 %s16, 2
      %s23 = sadd.s32 %s16, 1
      %s24 = ssub.s32 %s16, %s23
      %p25 = scmp.eq.s32.totalorder %s24, 0
      %s27 = sadd.s32 %s26, 1
      %s28 = scalar_select %p25, %s26, %s27
      %p31 = pneg %p25
      %p32 = scmp.eq.s32.totalorder %s16, 1
      %p33 = por %p31, %p32
      %p34 = scmp.ne.s32.totalorder %s26, %s29
      %p35 = scmp.eq.s32.totalorder %s16, 0
      %p36 = por %p34, %p35
      %p37 = scmp.ne.s32.totalorder %s26, %s29
      %p38 = scmp.eq.s32.totalorder %s21, 1
      %p39 = por %p37, %p38
      %p40 = scmp.ne.s32.totalorder %s29, %s30
      %p41 = scmp.eq.s32.totalorder %s21, 0
      %p42 = por %p40, %p41
      %p43 = scmp.ne.s32.totalorder %s29, %s30
      %p44 = scmp.eq.s32.totalorder %s22, 1
      %p45 = por %p43, %p44
      %p47 = scmp.ne.s32.totalorder %s30, %s46
      %p48 = scmp.eq.s32.totalorder %s22, 0
      %p49 = por %p47, %p48
      %s51 = sadd.s32 %s50, 1
      %p54 = scmp.eq.s32.totalorder %s16, 1
      %p55 = scmp.ne.s32.totalorder %s50, %s52
      %p56 = scmp.eq.s32.totalorder %s16, 0
      %p57 = por %p55, %p56
      %p58 = scmp.ne.s32.totalorder %s50, %s52
      %p59 = scmp.eq.s32.totalorder %s21, 1
      %p60 = por %p58, %p59
      %p61 = scmp.ne.s32.totalorder %s52, %s53
      %p62 = scmp.eq.s32.totalorder %s21, 0
      %p63 = por %p61, %p62
      %p64 = scmp.ne.s32.totalorder %s52, %s53
      %p65 = scmp.eq.s32.totalorder %s22, 1
      %p66 = por %p64, %p65
      %p68 = scmp.ne.s32.totalorder %s53, %s67
      %p69 = scmp.eq.s32.totalorder %s22, 0
      %p70 = por %p68, %p69
      %s72 = sadd.s32 %s71, 1
      %p75 = scmp.eq.s32.totalorder %s16, 1
      %p76 = scmp.ne.s32.totalorder %s71, %s73
      %p77 = scmp.eq.s32.totalorder %s16, 0
      %p78 = por %p76, %p77
      %p79 = scmp.ne.s32.totalorder %s71, %s73
      %p80 = scmp.eq.s32.totalorder %s21, 1
      %p81 = por %p79, %p80
      %p82 = scmp.ne.s32.totalorder %s73, %s74
      %p83 = scmp.eq.s32.totalorder %s21, 0
      %p84 = por %p82, %p83
      %p85 = scmp.ne.s32.totalorder %s73, %s74
      %p86 = scmp.eq.s32.totalorder %s22, 1
      %p87 = por %p85, %p86
      %p89 = scmp.ne.s32.totalorder %s74, %s88
      %p90 = scmp.eq.s32.totalorder %s22, 0
      %p91 = por %p89, %p90
      %s93 = sadd.s32 %s92, 1
      %p96 = scmp.eq.s32.totalorder %s16, 1
      %p97 = scmp.ne.s32.totalorder %s92, %s94
      %p98 = scmp.eq.s32.totalorder %s16, 0
      %p99 = por %p97, %p98
      %p100 = scmp.ne.s32.totalorder %s92, %s94
      %p101 = scmp.eq.s32.totalorder %s21, 1
      %p102 = por %p100, %p101
      %p103 = scmp.ne.s32.totalorder %s94, %s95
      %p104 = scmp.eq.s32.totalorder %s21, 0
      %p105 = por %p103, %p104
      %p106 = scmp.ne.s32.totalorder %s94, %s95
      %p107 = scmp.eq.s32.totalorder %s22, 1
      %p108 = por %p106, %p107
      %p110 = scmp.ne.s32.totalorder %s95, %s109
      %p111 = scmp.eq.s32.totalorder %s22, 0
      %p112 = por %p110, %p111
      %s114 = sadd.s32 %s113, 1
      %p117 = scmp.eq.s32.totalorder %s16, 1
      %p118 = scmp.ne.s32.totalorder %s113, %s115
      %p119 = scmp.eq.s32.totalorder %s16, 0
      %p120 = por %p118, %p119
      %p121 = scmp.ne.s32.totalorder %s113, %s115
      %p122 = scmp.eq.s32.totalorder %s21, 1
      %p123 = por %p121, %p122
      %p124 = scmp.ne.s32.totalorder %s115, %s116
      %p125 = scmp.eq.s32.totalorder %s21, 0
      %p126 = por %p124, %p125
      %p127 = scmp.ne.s32.totalorder %s115, %s116
      %p128 = scmp.eq.s32.totalorder %s22, 1
      %p129 = por %p127, %p128
      %p131 = scmp.ne.s32.totalorder %s116, %s130
      %p132 = scmp.eq.s32.totalorder %s22, 0
      %p133 = por %p131, %p132
      %s135 = sadd.s32 %s134, 1
      %p138 = scmp.eq.s32.totalorder %s16, 1
      %p139 = scmp.ne.s32.totalorder %s134, %s136
      %p140 = scmp.eq.s32.totalorder %s16, 0
      %p141 = por %p139, %p140
      %p142 = scmp.ne.s32.totalorder %s134, %s136
      %p143 = scmp.eq.s32.totalorder %s21, 1
      %p144 = por %p142, %p143
      %p145 = scmp.ne.s32.totalorder %s136, %s137
      %p146 = scmp.eq.s32.totalorder %s21, 0
      %p147 = por %p145, %p146
      %p148 = scmp.ne.s32.totalorder %s136, %s137
      %p149 = scmp.eq.s32.totalorder %s22, 1
      %p150 = por %p148, %p149
      %p152 = scmp.ne.s32.totalorder %s137, %s151
      %p153 = scmp.eq.s32.totalorder %s22, 0
      %p154 = por %p152, %p153
      %s156 = sadd.s32 %s155, 1
      %p159 = scmp.eq.s32.totalorder %s16, 1
      %p160 = scmp.ne.s32.totalorder %s155, %s157
      %p161 = scmp.eq.s32.totalorder %s16, 0
      %p162 = por %p160, %p161
      %p163 = scmp.ne.s32.totalorder %s155, %s157
      %p164 = scmp.eq.s32.totalorder %s21, 1
      %p165 = por %p163, %p164
      %p166 = scmp.ne.s32.totalorder %s157, %s158
      %p167 = scmp.eq.s32.totalorder %s21, 0
      %p168 = por %p166, %p167
      %p169 = scmp.ne.s32.totalorder %s157, %s158
      %p170 = scmp.eq.s32.totalorder %s22, 1
      %p171 = por %p169, %p170
      %p173 = scmp.ne.s32.totalorder %s158, %s172
      %p174 = scmp.eq.s32.totalorder %s22, 0
      %p175 = por %p173, %p174
      %s176 = ssub.s32 %s16, %s23
      %p177 = scmp.eq.s32.totalorder %s176, 0
      %s179 = sadd.s32 %s178, 1
      %s180 = scalar_select %p177, %s178, %s179
      %p183 = pneg %p177
      %p184 = scmp.eq.s32.totalorder %s16, 1
      %p185 = por %p183, %p184
      %p186 = scmp.ne.s32.totalorder %s178, %s181
      %p187 = scmp.eq.s32.totalorder %s16, 0
      %p188 = por %p186, %p187
      %p189 = scmp.ne.s32.totalorder %s178, %s181
      %p190 = scmp.eq.s32.totalorder %s21, 1
      %p191 = por %p189, %p190
      %p192 = scmp.ne.s32.totalorder %s181, %s182
      %p193 = scmp.eq.s32.totalorder %s21, 0
      %p194 = por %p192, %p193
      %p195 = scmp.ne.s32.totalorder %s181, %s182
      %p196 = scmp.eq.s32.totalorder %s22, 1
      %p197 = por %p195, %p196
      %p199 = scmp.ne.s32.totalorder %s182, %s198
      %p200 = scmp.eq.s32.totalorder %s22, 0
      %p201 = por %p199, %p200
      %p202 = scmp.le.s32.totalorder 1, %s16
      %p203 = scmp.lt.s32.totalorder %s16, 3
      %p204 = pnand %p202, %p203
      %p205 = pneg %p204
      // Predicated region
      $region9: #{roberta_embedding_forward.1} parent=5 // pred_check
        _
      $region10: #{roberta_embedding_forward.1} parent=5 // pred_check_branch
        %207 = sbr.rel (%p204) target = $region12
      $region11: #{roberta_embedding_forward.1} parent=5 // pred_region
        %s208 = ssub.s32 %s16, 1
        // Predicated region
        $region13: #{roberta_embedding_forward.1} parent=11 // pred_check
          %p209 = pneg %p63
        $region14: #{roberta_embedding_forward.1} parent=11 // pred_check_branch
          %211 = sbr.rel (%p209) target = $region16
        $region15: #{roberta_embedding_forward.1} parent=11 // pred_region
          _
        $region16: #{roberta_embedding_forward.1} parent=11 // pred_fallthru
          _
        // Predicated region
        $region17: #{roberta_embedding_forward.1} parent=11 // pred_check
          %p212 = pneg %p84
        $region18: #{roberta_embedding_forward.1} parent=11 // pred_check_branch
          %214 = sbr.rel (%p212) target = $region20
        $region19: #{roberta_embedding_forward.1} parent=11 // pred_region
          _
        $region20: #{roberta_embedding_forward.1} parent=11 // pred_fallthru
          _
        // Predicated region
        $region21: #{roberta_embedding_forward.1} parent=11 // pred_check
          %p215 = pneg %p105
        $region22: #{roberta_embedding_forward.1} parent=11 // pred_check_branch
          %217 = sbr.rel (%p215) target = $region24
        $region23: #{roberta_embedding_forward.1} parent=11 // pred_region
          _
        $region24: #{roberta_embedding_forward.1} parent=11 // pred_fallthru
          _
        // Predicated region
        $region25: #{roberta_embedding_forward.1} parent=11 // pred_check
          %p218 = pneg %p126
        $region26: #{roberta_embedding_forward.1} parent=11 // pred_check_branch
          %220 = sbr.rel (%p218) target = $region28
        $region27: #{roberta_embedding_forward.1} parent=11 // pred_region
          _
        $region28: #{roberta_embedding_forward.1} parent=11 // pred_fallthru
          _
        // Predicated region
        $region29: #{roberta_embedding_forward.1} parent=11 // pred_check
          %p221 = pneg %p147
        $region30: #{roberta_embedding_forward.1} parent=11 // pred_check_branch
          %223 = sbr.rel (%p221) target = $region32
        $region31: #{roberta_embedding_forward.1} parent=11 // pred_region
          _
        $region32: #{roberta_embedding_forward.1} parent=11 // pred_fallthru
          _
        // Predicated region
        $region33: #{roberta_embedding_forward.1} parent=11 // pred_check
          %p224 = pneg %p168
        $region34: #{roberta_embedding_forward.1} parent=11 // pred_check_branch
          %226 = sbr.rel (%p224) target = $region36
        $region35: #{roberta_embedding_forward.1} parent=11 // pred_region
          _
        $region36: #{roberta_embedding_forward.1} parent=11 // pred_fallthru
          _
      $region12: #{roberta_embedding_forward.1} parent=5 // pred_fallthru
        _
      %p227 = scmp.lt.s32.totalorder %s16, 2
      // Predicated region
      $region37: #{roberta_embedding_forward.1} parent=5 // pred_check
        %p228 = pneg %p227
      $region38: #{roberta_embedding_forward.1} parent=5 // pred_check_branch
        %230 = sbr.rel (%p228) target = $region40
      $region39: #{roberta_embedding_forward.1} parent=5 // pred_region
        // Predicated region
        $region41: #{roberta_embedding_forward.1} parent=39 // pred_check
          %p231 = pneg %p36
        $region42: #{roberta_embedding_forward.1} parent=39 // pred_check_branch
          %233 = sbr.rel (%p231) target = $region44
        $region43: #{roberta_embedding_forward.1} parent=39 // pred_region
          %p234 = scmp.lt.s32.totalorder %s16, 1
          %s235 = scalar_select %p234, %s16, 1
          %s236 = smul.addr %s235, 8
          %s237 = scalar_lea.vmem %s0, %s236
        $region44: #{roberta_embedding_forward.1} parent=39 // pred_fallthru
          _
      $region40: #{roberta_embedding_forward.1} parent=5 // pred_fallthru
        _
      %p238 = scmp.le.s32.totalorder 1, %s16
      %p239 = scmp.lt.s32.totalorder %s16, 3
      %p240 = pnand %p238, %p239
      %p241 = pneg %p240
      // Predicated region
      $region45: #{roberta_embedding_forward.1} parent=5 // pred_check
        _
      $region46: #{roberta_embedding_forward.1} parent=5 // pred_check_branch
        %243 = sbr.rel (%p240) target = $region48
      $region47: #{roberta_embedding_forward.1} parent=5 // pred_region
        %s244 = ssub.s32 %s16, 1
        %p245 = scmp.lt.s32.totalorder %s21, 1
        %s246 = scalar_select %p245, %s21, 1
        %s247 = smul.addr %s246, 8
        %s248 = scalar_lea.vmem %s0, %s247
        %p249 = pneg %p42
        %p250 = pneg %p39
        %p251 = pneg %p63
        %p252 = pneg %p60
        %p253 = pneg %p84
        %p254 = pneg %p81
        %p255 = pneg %p105
        %p256 = pneg %p102
        %p257 = pneg %p126
        %p258 = pneg %p123
        %p259 = pneg %p147
        %p260 = pneg %p144
        %p261 = pneg %p168
        %p262 = pneg %p165
        %p263 = pneg %p194
        %p264 = pneg %p191
        %s265 = sand.u32 %s181, 1
        %s266 = scalar_lea.sflag [#allocation3], %s265
        %s267 = sand.u32 %s181, 1
        %s268 = smul.addr %s267, 8
        %s269 = scalar_lea.vmem [#allocation2], %s268
        %p270 = scmp.lt.s32.totalorder %s21, 1
        %s271 = scalar_select %p270, %s21, 1
        %s272 = smul.addr %s271, 8
        %s273 = scalar_lea.vmem %s0, %s272
        %v274 = vld [vmem:[%s273] sm:$0xff]
        %v275 = vlaneseq
        %v276 = vshrl.u32 %v275, 7
        %vm277 = vcmp.lt.s32.totalorder %v276, %v274
        %v278 = vadd.s32 %v276, 1
        %v279 = vadd.s32 %v278, 1
        %v280 = vsel %vm277, %v279, 1
        %v281 = vlaneseq
        %v282 = vand.u32 %v281, 127
        %v283 = vadd.s32 %v282, 128
        %284 = vset.pattern.permute.xlu0 0
        %285 = vperm.xlu0 %284, %v274
        %v286 = vpop.permute.xlu0 %285
        %vm287 = vcmp.eq.s32.totalorder %v282, %v286
        %vm288 = vcmp.eq.s32.totalorder %v283, %v286
        %v289 = vadd.s32 %v280, 100
        %290 = vset.pattern.permute.xlu0 1
        %291 = vperm.xlu0 %290, %v289
        %v292 = vpop.permute.xlu0 %291
        %vm293 = vcmp.eq.s32.totalorder %v282, %v292
        %vm294 = vcmp.eq.s32.totalorder %v283, %v292
        %vm295 = vmor %vm287, %vm293
        %vm296 = vmor %vm288, %vm294
        %vm297 = vcmp.eq.s32.totalorder %v282, 164
        %vm298 = vcmp.eq.s32.totalorder %v283, 164
        %vm299 = vmor %vm295, %vm297
        %vm300 = vmor %vm296, %vm298
        %v301 = vsel %vm299, 1, 0
        %v302 = vsel %vm300, 1, 0
        %v303 = vcvt.s32.f32 %v301
        %v304 = vcvt.s32.f32 %v302
        %v305 = vld [vmem:[%s1] sm:$0xff]
        %v306 = vld [vmem:[%s1 + $0x8] sm:$0xff]
        %v307 = vld [vmem:[%s1 + $0x10] sm:$0xff]
        %v308 = vld [vmem:[%s1 + $0x18] sm:$0xff]
        %v309 = vld [vmem:[%s1 + $0x20] sm:$0xff]
        %v310 = vld [vmem:[%s1 + $0x28] sm:$0xff]
        %v311 = vld [vmem:[%s1 + $0x30] sm:$0xff]
        %v312 = vld [vmem:[%s1 + $0x38] sm:$0xff]
        %v313 = vld [vmem:[%s1 + $0x40] sm:$0xff]
        %v314 = vld [vmem:[%s1 + $0x48] sm:$0xff]
        %v315 = vld [vmem:[%s1 + $0x50] sm:$0xff]
        %v316 = vld [vmem:[%s1 + $0x58] sm:$0xff]
        %v317 = vld [vmem:[%s1 + $0x60] sm:$0xff]
        %v318 = vld [vmem:[%s1 + $0x68] sm:$0xff]
        %v319 = vld [vmem:[%s1 + $0x70] sm:$0xff]
        %v320 = vld [vmem:[%s1 + $0x78] sm:$0xff]
        %v321 = vld [vmem:[%s1 + $0x80] sm:$0xff]
        %v322 = vld [vmem:[%s1 + $0x88] sm:$0xff]
        %v323 = vld [vmem:[%s1 + $0x90] sm:$0xff]
        %v324 = vld [vmem:[%s1 + $0x98] sm:$0xff]
        %v325 = vld [vmem:[%s1 + $0xa0] sm:$0xff]
        %vm326 = vcmask 326656
        %v328 = vsel %vm326, %v304, 0
        %330 = vmatprep.subr.mxu0 0.0
        %331 = vmatpush1.msra.mxu0 %v305
        %332 = vmatprep.subr.mxu0 0.0
        %333 = vmatpush1.msra.mxu0 %v306
        %334 = vmatprep.subr.mxu0 0.0
        %335 = vmatpush1.msra.mxu0 %v307
        %336 = vmatprep.subr.mxu0 0.0
        %337 = vmatpush1.msra.mxu0 %v308
        %338 = vmatprep.subr.mxu0 0.0
        %339 = vmatpush1.msra.mxu0 %v309
        %340 = vmatprep.subr.mxu0 0.0
        %341 = vmatpush1.msra.mxu0 %v310
        %342 = vmatprep.subr.mxu0 0.0
        %343 = vmatpush1.msra.mxu0 %v311
        %344 = vmatprep.subr.mxu0 0.0
        %345 = vmatpush1.msra.mxu0 %v312
        %346 = vmatprep.subr.mxu0 0.0
        %347 = vmatpush1.msra.mxu0 %v313
        %348 = vmatprep.subr.mxu0 0.0
        %349 = vmatpush1.msra.mxu0 %v314
        %350 = vmatprep.subr.mxu0 0.0
        %351 = vmatpush1.msra.mxu0 %v315
        %352 = vmatprep.subr.mxu0 0.0
        %353 = vmatpush1.msra.mxu0 %v316
        %354 = vmatprep.subr.mxu0 0.0
        %355 = vmatpush1.msra.mxu0 %v317
        %356 = vmatprep.subr.mxu0 0.0
        %357 = vmatpush1.msra.mxu0 %v318
        %358 = vmatprep.subr.mxu0 0.0
        %359 = vmatpush1.msra.mxu0 %v319
        %360 = vmatprep.subr.mxu0 0.0
        %361 = vmatpush1.msra.mxu0 %v320
        %362 = vmatprep.subr.mxu0 0.0
        %363 = vmatpush1.msra.mxu0 %v321
        %364 = vmatprep.subr.mxu0 0.0
        %365 = vmatpush1.msra.mxu0 %v322
        %366 = vmatprep.subr.mxu0 0.0
        %367 = vmatpush1.msra.mxu0 %v323
        %368 = vmatprep.subr.mxu0 0.0
        %369 = vmatpush1.msra.mxu0 %v324
        %370 = vmatprep.subr.mxu0 0.0
        %371 = vmatpush1.msra.mxu0 %v325
        %372 = vmatprep.subr.mxu0 0.0
        %373 = vmatpush1.msra.mxu0 0.0
        %374 = vmatprep.subr.mxu0 0.0
        %375 = vmatpush1.msra.mxu0 0.0
        %376 = vmatprep.subr.mxu0 0.0
        %377 = vmatpush1.msra.mxu0 0.0
        %378 = vmatprep.subr.mxu0 0.0
        %379 = vmatpush1.msra.mxu0 0.0
        %380 = vmatprep.subr.mxu0 0.0
        %381 = vmatpush1.msra.mxu0 0.0
        %382 = vmatprep.subr.mxu0 0.0
        %383 = vmatpush1.msra.mxu0 0.0
        %384 = vmatprep.subr.mxu0 0.0
        %385 = vmatpush1.msra.mxu0 0.0
        %386 = vmatprep.subr.mxu0 0.0
        %387 = vmatpush1.msra.mxu0 0.0
        %388 = vmatprep.subr.mxu0 0.0
        %389 = vmatpush1.msra.mxu0 0.0
        %390 = vmatprep.subr.mxu0 0.0
        %391 = vmatpush1.msra.mxu0 0.0
        %392 = vmatprep.subr.mxu0 0.0
        %393 = vmatpush1.msra.mxu0 0.0
        %394 = vmatprep.mubr.f32.mxu0 %v328
        %395 = vmatmul.mubr.f32.gmra.mrb[0].mxu0 %v303
        %v396 = vpop.f32.mrb[0].mxu0
        %v397 = vadd.f32 0.0, %v396
        %v398 = vpop.f32.mrb[0].mxu0
        %399 = vdwg.mxu0
        %v400 = vld [vmem:[%s1 + $0xa5] sm:$0x1]
        %v401 = vld [vmem:[%s1 + $0xa6] sm:$0x1]
        %vm402 = vcmask 261120
        %v403 = vsel %vm402, %v397, 0.0
        %404 = vadd.xlane.f32.xlu0 %v403
        %v405 = vpop.xlane.xlu0 %404
        %v406 = vrcp.pop 32.0
        %v407 = vmul.f32 %v405, %v406
        %v408 = vsub.f32 %v397, %v407
        %v409 = vmul.f32 %v408, %v408
        %v410 = vsel %vm402, %v409, 0.0
        %411 = vadd.xlane.f32.xlu0 %v410
        %v412 = vpop.xlane.xlu0 %411
        %v413 = vmul.f32 %v412, %v406
        %v414 = vadd.f32 %v413, 1e-05
        %v415 = vrsqrt.pop %v414
        %v416 = vmul.f32 %v408, %v415
        %v417 = vlaneseq
        %v418 = vshrl.u32 %v417, 7
        %v419 = vsub.s32 0, %v418
        %v420 = vrot.slane %v400, %v419
        %v421 = vmul.f32 %v416, %v420
        %v422 = vlaneseq
        %v423 = vshrl.u32 %v422, 7
        %v424 = vsub.s32 0, %v423
        %v425 = vrot.slane %v401, %v424
        %v426 = vadd.f32 %v421, %v425
        %427 = vset.pattern.permute.xlu0 1
        %428 = vperm.xlu0 %427, %v274
        %v429 = vpop.permute.xlu0 %428
        %vm430 = vcmp.lt.s32.totalorder %v282, %v429
        %v431 = vsel %vm430, 0.0, -10000.0
        %v432 = vld [vmem:[%s6] sm:$0xff]
        %v433 = vld [vmem:[%s2] sm:$0xff]
        %v434 = vld [vmem:[%s2 + $0x8] sm:$0xff]
        %v435 = vld [vmem:[%s2 + $0x10] sm:$0xff]
        %v436 = vld [vmem:[%s2 + $0x18] sm:$0xff]
        %v437 = vlaneseq
        %v438 = vshrl.u32 %v437, 7
        %v439 = vsub.s32 0, %v438
        %v440 = vrot.slane %v432, %v439
        %v442 = vsel %vm402, %v426, 0
        %444 = vmatprep.subr.mxu0 0.0
        %445 = vmatpush1.msra.mxu0 %v433
        %446 = vmatprep.subr.mxu0 0.0
        %447 = vmatpush1.msra.mxu0 %v434
        %448 = vmatprep.subr.mxu0 0.0
        %449 = vmatpush1.msra.mxu0 %v435
        %450 = vmatprep.subr.mxu0 0.0
        %451 = vmatpush1.msra.mxu0 %v436
        %452 = vmatprep.subr.mxu0 0.0
        %453 = vmatpush1.msra.mxu0 0.0
        %454 = vmatprep.subr.mxu0 0.0
        %455 = vmatpush1.msra.mxu0 0.0
        %456 = vmatprep.subr.mxu0 0.0
        %457 = vmatpush1.msra.mxu0 0.0
        %458 = vmatprep.subr.mxu0 0.0
        %459 = vmatpush1.msra.mxu0 0.0
        %460 = vmatprep.subr.mxu0 0.0
        %461 = vmatpush1.msra.mxu0 0.0
        %462 = vmatprep.subr.mxu0 0.0
        %463 = vmatpush1.msra.mxu0 0.0
        %464 = vmatprep.subr.mxu0 0.0
        %465 = vmatpush1.msra.mxu0 0.0
        %466 = vmatprep.subr.mxu0 0.0
        %467 = vmatpush1.msra.mxu0 0.0
        %468 = vmatprep.subr.mxu0 0.0
        %469 = vmatpush1.msra.mxu0 0.0
        %470 = vmatprep.subr.mxu0 0.0
        %471 = vmatpush1.msra.mxu0 0.0
        %472 = vmatprep.subr.mxu0 0.0
        %473 = vmatpush1.msra.mxu0 0.0
        %474 = vmatprep.subr.mxu0 0.0
        %475 = vmatpush1.msra.mxu0 0.0
        %476 = vmatprep.subr.mxu0 0.0
        %477 = vmatpush1.msra.mxu0 0.0
        %478 = vmatprep.subr.mxu0 0.0
        %479 = vmatpush1.msra.mxu0 0.0
        %480 = vmatprep.subr.mxu0 0.0
        %481 = vmatpush1.msra.mxu0 0.0
        %482 = vmatprep.subr.mxu0 0.0
        %483 = vmatpush1.msra.mxu0 0.0
        %484 = vmatprep.subr.mxu0 0.0
        %485 = vmatpush1.msra.mxu0 0.0
        %486 = vmatprep.subr.mxu0 0.0
        %487 = vmatpush1.msra.mxu0 0.0
        %488 = vmatprep.subr.mxu0 0.0
        %489 = vmatpush1.msra.mxu0 0.0
        %490 = vmatprep.subr.mxu0 0.0
        %491 = vmatpush1.msra.mxu0 0.0
        %492 = vmatprep.subr.mxu0 0.0
        %493 = vmatpush1.msra.mxu0 0.0
        %494 = vmatprep.subr.mxu0 0.0
        %495 = vmatpush1.msra.mxu0 0.0
        %496 = vmatprep.subr.mxu0 0.0
        %497 = vmatpush1.msra.mxu0 0.0
        %498 = vmatprep.subr.mxu0 0.0
        %499 = vmatpush1.msra.mxu0 0.0
        %500 = vmatprep.subr.mxu0 0.0
        %501 = vmatpush1.msra.mxu0 0.0
        %502 = vmatprep.subr.mxu0 0.0
        %503 = vmatpush1.msra.mxu0 0.0
        %504 = vmatprep.subr.mxu0 0.0
        %505 = vmatpush1.msra.mxu0 0.0
        %506 = vmatprep.subr.mxu0 0.0
        %507 = vmatpush1.msra.mxu0 0.0
        %508 = vmatprep.mubr.f32.mxu0 0.0
        %509 = vmatmul.mubr.f32.gmra.mrb[0].mxu0 %v442
        %v510 = vpop.f32.mrb[0].mxu0
        %v511 = vadd.f32 %v440, %v510
        %v512 = vpop.f32.mrb[0].mxu0
        %513 = vdwg.mxu0
        %v514 = vlaneseq
        %v515 = vshrl.u32 %v514, 7
        %v516 = vsub.s32 0, %v515
        %v517 = vrot.slane %v431, %v516
        %519 = vrot.lane.b32.xlu0 %v511, 96
        %v520 = vpop.permute.xlu0 %519
        %vm521 = vcmask 130048
        %v522 = vsel %vm521, %v511, 0
        %v524 = vsel %vm521, %v520, 0
        %526 = vmatprep.subr.mxu0 0.0
        %527 = vmatpush1.xpose.msra.mxu0 %v524
        %528 = vmatprep.subr.mxu0 0.0
        %529 = vmatpush1.xpose.msra.mxu0 0.0
        %530 = vmatprep.subr.mxu0 0.0
        %531 = vmatpush1.xpose.msra.mxu0 0.0
        %532 = vmatprep.subr.mxu0 0.0
        %533 = vmatpush1.xpose.msra.mxu0 0.0
        %534 = vmatprep.subr.mxu0 0.0
        %535 = vmatpush1.xpose.msra.mxu0 0.0
        %536 = vmatprep.subr.mxu0 0.0
        %537 = vmatpush1.xpose.msra.mxu0 0.0
        %538 = vmatprep.subr.mxu0 0.0
        %539 = vmatpush1.xpose.msra.mxu0 0.0
        %540 = vmatprep.subr.mxu0 0.0
        %541 = vmatpush1.xpose.msra.mxu0 0.0
        %542 = vmatprep.subr.mxu0 0.0
        %543 = vmatpush1.xpose.msra.mxu0 0.0
        %544 = vmatprep.subr.mxu0 0.0
        %545 = vmatpush1.xpose.msra.mxu0 0.0
        %546 = vmatprep.subr.mxu0 0.0
        %547 = vmatpush1.xpose.msra.mxu0 0.0
        %548 = vmatprep.subr.mxu0 0.0
        %549 = vmatpush1.xpose.msra.mxu0 0.0
        %550 = vmatprep.subr.mxu0 0.0
        %551 = vmatpush1.xpose.msra.mxu0 0.0
        %552 = vmatprep.subr.mxu0 0.0
        %553 = vmatpush1.xpose.msra.mxu0 0.0
        %554 = vmatprep.subr.mxu0 0.0
        %555 = vmatpush1.xpose.msra.mxu0 0.0
        %556 = vmatprep.subr.mxu0 0.0
        %557 = vmatpush1.xpose.msra.mxu0 0.0
        %558 = vmatprep.subr.mxu0 0.0
        %559 = vmatpush1.xpose.msra.mxu0 0.0
        %560 = vmatprep.subr.mxu0 0.0
        %561 = vmatpush1.xpose.msra.mxu0 0.0
        %562 = vmatprep.subr.mxu0 0.0
        %563 = vmatpush1.xpose.msra.mxu0 0.0
        %564 = vmatprep.subr.mxu0 0.0
        %565 = vmatpush1.xpose.msra.mxu0 0.0
        %566 = vmatprep.subr.mxu0 0.0
        %567 = vmatpush1.xpose.msra.mxu0 0.0
        %568 = vmatprep.subr.mxu0 0.0
        %569 = vmatpush1.xpose.msra.mxu0 0.0
        %570 = vmatprep.subr.mxu0 0.0
        %571 = vmatpush1.xpose.msra.mxu0 0.0
        %572 = vmatprep.subr.mxu0 0.0
        %573 = vmatpush1.xpose.msra.mxu0 0.0
        %574 = vmatprep.subr.mxu0 0.0
        %575 = vmatpush1.xpose.msra.mxu0 0.0
        %576 = vmatprep.subr.mxu0 0.0
        %577 = vmatpush1.xpose.msra.mxu0 0.0
        %578 = vmatprep.subr.mxu0 0.0
        %579 = vmatpush1.xpose.msra.mxu0 0.0
        %580 = vmatprep.subr.mxu0 0.0
        %581 = vmatpush1.xpose.msra.mxu0 0.0
        %582 = vmatprep.subr.mxu0 0.0
        %583 = vmatpush1.xpose.msra.mxu0 0.0
        %584 = vmatprep.subr.mxu0 0.0
        %585 = vmatpush1.xpose.msra.mxu0 0.0
        %586 = vmatprep.subr.mxu0 0.0
        %587 = vmatpush1.xpose.msra.mxu0 0.0
        %588 = vmatprep.subr.mxu0 0.0
        %589 = vmatpush1.xpose.msra.mxu0 0.0
        %590 = vmatprep.mubr.f32.mxu0 0.0
        %591 = vmatmul.mubr.f32.gmra.mrb[0].mxu0 %v522
        %v592 = vpop.f32.mrb[0].mxu0
        %v593 = vadd.f32 %v517, %v592
        %v594 = vpop.f32.mrb[0].mxu0
        %595 = vdwg.mxu0
        %vm596 = vcmask 64512
        %v597 = vsel %vm596, %v593, -inf
        %598 = vmax.xlane.f32.xlu0 %v597
        %v599 = vpop.xlane.xlu0 %598
        %v600 = vsub.f32 %v593, %v599
        %v601 = vmul.f32 %v600, 1.442695
        %v602 = vpow.pop %v601
        %v603 = vsel %vm596, %v602, 0.0
        %604 = vadd.xlane.f32.xlu0 %v603
        %v605 = vpop.xlane.xlu0 %604
        %v606 = vrcp.pop %v605
        %v607 = vmul.f32 %v602, %v606
        %608 = vrot.lane.b32.xlu0 %v511, 64
        %v609 = vpop.permute.xlu0 %608
        %v612 = vsel %vm596, %v607, 0
        %614 = vmatprep.subr.mxu0 0.0
        %615 = vmatpush1.msra.mxu0 %v609
        %616 = vmatprep.subr.mxu0 0.0
        %617 = vmatpush1.msra.mxu0 0.0
        %618 = vmatprep.subr.mxu0 0.0
        %619 = vmatpush1.msra.mxu0 0.0
        %620 = vmatprep.subr.mxu0 0.0
        %621 = vmatpush1.msra.mxu0 0.0
        %622 = vmatprep.subr.mxu0 0.0
        %623 = vmatpush1.msra.mxu0 0.0
        %624 = vmatprep.subr.mxu0 0.0
        %625 = vmatpush1.msra.mxu0 0.0
        %626 = vmatprep.subr.mxu0 0.0
        %627 = vmatpush1.msra.mxu0 0.0
        %628 = vmatprep.subr.mxu0 0.0
        %629 = vmatpush1.msra.mxu0 0.0
        %630 = vmatprep.subr.mxu0 0.0
        %631 = vmatpush1.msra.mxu0 0.0
        %632 = vmatprep.subr.mxu0 0.0
        %633 = vmatpush1.msra.mxu0 0.0
        %634 = vmatprep.subr.mxu0 0.0
        %635 = vmatpush1.msra.mxu0 0.0
        %636 = vmatprep.subr.mxu0 0.0
        %637 = vmatpush1.msra.mxu0 0.0
        %638 = vmatprep.subr.mxu0 0.0
        %639 = vmatpush1.msra.mxu0 0.0
        %640 = vmatprep.subr.mxu0 0.0
        %641 = vmatpush1.msra.mxu0 0.0
        %642 = vmatprep.subr.mxu0 0.0
        %643 = vmatpush1.msra.mxu0 0.0
        %644 = vmatprep.subr.mxu0 0.0
        %645 = vmatpush1.msra.mxu0 0.0
        %646 = vmatprep.subr.mxu0 0.0
        %647 = vmatpush1.msra.mxu0 0.0
        %648 = vmatprep.subr.mxu0 0.0
        %649 = vmatpush1.msra.mxu0 0.0
        %650 = vmatprep.subr.mxu0 0.0
        %651 = vmatpush1.msra.mxu0 0.0
        %652 = vmatprep.subr.mxu0 0.0
        %653 = vmatpush1.msra.mxu0 0.0
        %654 = vmatprep.subr.mxu0 0.0
        %655 = vmatpush1.msra.mxu0 0.0
        %656 = vmatprep.subr.mxu0 0.0
        %657 = vmatpush1.msra.mxu0 0.0
        %658 = vmatprep.subr.mxu0 0.0
        %659 = vmatpush1.msra.mxu0 0.0
        %660 = vmatprep.subr.mxu0 0.0
        %661 = vmatpush1.msra.mxu0 0.0
        %662 = vmatprep.subr.mxu0 0.0
        %663 = vmatpush1.msra.mxu0 0.0
        %664 = vmatprep.subr.mxu0 0.0
        %665 = vmatpush1.msra.mxu0 0.0
        %666 = vmatprep.subr.mxu0 0.0
        %667 = vmatpush1.msra.mxu0 0.0
        %668 = vmatprep.subr.mxu0 0.0
        %669 = vmatpush1.msra.mxu0 0.0
        %670 = vmatprep.subr.mxu0 0.0
        %671 = vmatpush1.msra.mxu0 0.0
        %672 = vmatprep.subr.mxu0 0.0
        %673 = vmatpush1.msra.mxu0 0.0
        %674 = vmatprep.subr.mxu0 0.0
        %675 = vmatpush1.msra.mxu0 0.0
        %676 = vmatprep.subr.mxu0 0.0
        %677 = vmatpush1.msra.mxu0 0.0
        %678 = vmatprep.mubr.f32.mxu0 0.0
        %679 = vmatmul.mubr.f32.gmra.mrb[0].mxu0 %v612
        %v680 = vpop.f32.mrb[0].mxu0
        %v681 = vadd.f32 0.0, %v680
        %v682 = vpop.f32.mrb[0].mxu0
        %683 = vdwg.mxu0
        %684 = vrot.lane.b32.xlu0 %v511, 112
        %v685 = vpop.permute.xlu0 %684
        %686 = vrot.lane.b32.xlu0 %v511, 80
        %v687 = vpop.permute.xlu0 %686
        %v688 = vsel %vm521, %v685, 0
        %v690 = vsel %vm521, %v687, 0
        %692 = vmatprep.subr.mxu0 0.0
        %693 = vmatpush1.xpose.msra.mxu0 %v690
        %694 = vmatprep.subr.mxu0 0.0
        %695 = vmatpush1.xpose.msra.mxu0 0.0
        %696 = vmatprep.subr.mxu0 0.0
        %697 = vmatpush1.xpose.msra.mxu0 0.0
        %698 = vmatprep.subr.mxu0 0.0
        %699 = vmatpush1.xpose.msra.mxu0 0.0
        %700 = vmatprep.subr.mxu0 0.0
        %701 = vmatpush1.xpose.msra.mxu0 0.0
        %702 = vmatprep.subr.mxu0 0.0
        %703 = vmatpush1.xpose.msra.mxu0 0.0
        %704 = vmatprep.subr.mxu0 0.0
        %705 = vmatpush1.xpose.msra.mxu0 0.0
        %706 = vmatprep.subr.mxu0 0.0
        %707 = vmatpush1.xpose.msra.mxu0 0.0
        %708 = vmatprep.subr.mxu0 0.0
        %709 = vmatpush1.xpose.msra.mxu0 0.0
        %710 = vmatprep.subr.mxu0 0.0
        %711 = vmatpush1.xpose.msra.mxu0 0.0
        %712 = vmatprep.subr.mxu0 0.0
        %713 = vmatpush1.xpose.msra.mxu0 0.0
        %714 = vmatprep.subr.mxu0 0.0
        %715 = vmatpush1.xpose.msra.mxu0 0.0
        %716 = vmatprep.subr.mxu0 0.0
        %717 = vmatpush1.xpose.msra.mxu0 0.0
        %718 = vmatprep.subr.mxu0 0.0
        %719 = vmatpush1.xpose.msra.mxu0 0.0
        %720 = vmatprep.subr.mxu0 0.0
        %721 = vmatpush1.xpose.msra.mxu0 0.0
        %722 = vmatprep.subr.mxu0 0.0
        %723 = vmatpush1.xpose.msra.mxu0 0.0
        %724 = vmatprep.subr.mxu0 0.0
        %725 = vmatpush1.xpose.msra.mxu0 0.0
        %726 = vmatprep.subr.mxu0 0.0
        %727 = vmatpush1.xpose.msra.mxu0 0.0
        %728 = vmatprep.subr.mxu0 0.0
        %729 = vmatpush1.xpose.msra.mxu0 0.0
        %730 = vmatprep.subr.mxu0 0.0
        %731 = vmatpush1.xpose.msra.mxu0 0.0
        %732 = vmatprep.subr.mxu0 0.0
        %733 = vmatpush1.xpose.msra.mxu0 0.0
        %734 = vmatprep.subr.mxu0 0.0
        %735 = vmatpush1.xpose.msra.mxu0 0.0
        %736 = vmatprep.subr.mxu0 0.0
        %737 = vmatpush1.xpose.msra.mxu0 0.0
        %738 = vmatprep.subr.mxu0 0.0
        %739 = vmatpush1.xpose.msra.mxu0 0.0
        %740 = vmatprep.subr.mxu0 0.0
        %741 = vmatpush1.xpose.msra.mxu0 0.0
        %742 = vmatprep.subr.mxu0 0.0
        %743 = vmatpush1.xpose.msra.mxu0 0.0
        %744 = vmatprep.subr.mxu0 0.0
        %745 = vmatpush1.xpose.msra.mxu0 0.0
        %746 = vmatprep.subr.mxu0 0.0
        %747 = vmatpush1.xpose.msra.mxu0 0.0
        %748 = vmatprep.subr.mxu0 0.0
        %749 = vmatpush1.xpose.msra.mxu0 0.0
        %750 = vmatprep.subr.mxu0 0.0
        %751 = vmatpush1.xpose.msra.mxu0 0.0
        %752 = vmatprep.subr.mxu0 0.0
        %753 = vmatpush1.xpose.msra.mxu0 0.0
        %754 = vmatprep.subr.mxu0 0.0
        %755 = vmatpush1.xpose.msra.mxu0 0.0
        %756 = vmatprep.mubr.f32.mxu0 0.0
        %757 = vmatmul.mubr.f32.gmra.mrb[0].mxu0 %v688
        %v758 = vpop.f32.mrb[0].mxu0
        %v759 = vadd.f32 %v517, %v758
        %v760 = vpop.f32.mrb[0].mxu0
        %761 = vdwg.mxu0
        %v762 = vsel %vm596, %v759, -inf
        %763 = vmax.xlane.f32.xlu0 %v762
        %v764 = vpop.xlane.xlu0 %763
        %v765 = vsub.f32 %v759, %v764
        %v766 = vmul.f32 %v765, 1.442695
        %v767 = vpow.pop %v766
        %v768 = vsel %vm596, %v767, 0.0
        %769 = vadd.xlane.f32.xlu0 %v768
        %v770 = vpop.xlane.xlu0 %769
        %v771 = vrcp.pop %v770
        %v772 = vmul.f32 %v767, %v771
        %773 = vrot.lane.b32.xlu0 %v511, 48
        %v774 = vpop.permute.xlu0 %773
        %v777 = vsel %vm596, %v772, 0
        %779 = vmatprep.subr.mxu0 0.0
        %780 = vmatpush1.msra.mxu0 %v774
        %781 = vmatprep.subr.mxu0 0.0
        %782 = vmatpush1.msra.mxu0 0.0
        %783 = vmatprep.subr.mxu0 0.0
        %784 = vmatpush1.msra.mxu0 0.0
        %785 = vmatprep.subr.mxu0 0.0
        %786 = vmatpush1.msra.mxu0 0.0
        %787 = vmatprep.subr.mxu0 0.0
        %788 = vmatpush1.msra.mxu0 0.0
        %789 = vmatprep.subr.mxu0 0.0
        %790 = vmatpush1.msra.mxu0 0.0
        %791 = vmatprep.subr.mxu0 0.0
        %792 = vmatpush1.msra.mxu0 0.0
        %793 = vmatprep.subr.mxu0 0.0
        %794 = vmatpush1.msra.mxu0 0.0
        %795 = vmatprep.subr.mxu0 0.0
        %796 = vmatpush1.msra.mxu0 0.0
        %797 = vmatprep.subr.mxu0 0.0
        %798 = vmatpush1.msra.mxu0 0.0
        %799 = vmatprep.subr.mxu0 0.0
        %800 = vmatpush1.msra.mxu0 0.0
        %801 = vmatprep.subr.mxu0 0.0
        %802 = vmatpush1.msra.mxu0 0.0
        %803 = vmatprep.subr.mxu0 0.0
        %804 = vmatpush1.msra.mxu0 0.0
        %805 = vmatprep.subr.mxu0 0.0
        %806 = vmatpush1.msra.mxu0 0.0
        %807 = vmatprep.subr.mxu0 0.0
        %808 = vmatpush1.msra.mxu0 0.0
        %809 = vmatprep.subr.mxu0 0.0
        %810 = vmatpush1.msra.mxu0 0.0
        %811 = vmatprep.subr.mxu0 0.0
        %812 = vmatpush1.msra.mxu0 0.0
        %813 = vmatprep.subr.mxu0 0.0
        %814 = vmatpush1.msra.mxu0 0.0
        %815 = vmatprep.subr.mxu0 0.0
        %816 = vmatpush1.msra.mxu0 0.0
        %817 = vmatprep.subr.mxu0 0.0
        %818 = vmatpush1.msra.mxu0 0.0
        %819 = vmatprep.subr.mxu0 0.0
        %820 = vmatpush1.msra.mxu0 0.0
        %821 = vmatprep.subr.mxu0 0.0
        %822 = vmatpush1.msra.mxu0 0.0
        %823 = vmatprep.subr.mxu0 0.0
        %824 = vmatpush1.msra.mxu0 0.0
        %825 = vmatprep.subr.mxu0 0.0
        %826 = vmatpush1.msra.mxu0 0.0
        %827 = vmatprep.subr.mxu0 0.0
        %828 = vmatpush1.msra.mxu0 0.0
        %829 = vmatprep.subr.mxu0 0.0
        %830 = vmatpush1.msra.mxu0 0.0
        %831 = vmatprep.subr.mxu0 0.0
        %832 = vmatpush1.msra.mxu0 0.0
        %833 = vmatprep.subr.mxu0 0.0
        %834 = vmatpush1.msra.mxu0 0.0
        %835 = vmatprep.subr.mxu0 0.0
        %836 = vmatpush1.msra.mxu0 0.0
        %837 = vmatprep.subr.mxu0 0.0
        %838 = vmatpush1.msra.mxu0 0.0
        %839 = vmatprep.subr.mxu0 0.0
        %840 = vmatpush1.msra.mxu0 0.0
        %841 = vmatprep.subr.mxu0 0.0
        %842 = vmatpush1.msra.mxu0 0.0
        %843 = vmatprep.mubr.f32.mxu0 0.0
        %844 = vmatmul.mubr.f32.gmra.mrb[0].mxu0 %v777
        %v845 = vpop.f32.mrb[0].mxu0
        %v846 = vadd.f32 0.0, %v845
        %v847 = vpop.f32.mrb[0].mxu0
        %848 = vdwg.mxu0
        %850 = vrot.lane.b32.xlu0 %v846, 16
        %v851 = vpop.permute.xlu0 %850
        %v853 = vsel %vm521, %v681, %v851
        %v854 = vld [vmem:[%s3] sm:$0xff]
        %v855 = vld [vmem:[%s3 + $0x8] sm:$0xff]
        %v856 = vld [vmem:[%s3 + $0x10] sm:$0xff]
        %v857 = vld [vmem:[%s3 + $0x18] sm:$0xff]
        %v858 = vlaneseq
        %v859 = vshrl.u32 %v858, 7
        %v860 = vsub.s32 1, %v859
        %v861 = vrot.slane %v432, %v860
        %v863 = vsel %vm402, %v853, 0
        %865 = vmatprep.subr.mxu0 0.0
        %866 = vmatpush1.msra.mxu0 %v854
        %867 = vmatprep.subr.mxu0 0.0
        %868 = vmatpush1.msra.mxu0 %v855
        %869 = vmatprep.subr.mxu0 0.0
        %870 = vmatpush1.msra.mxu0 %v856
        %871 = vmatprep.subr.mxu0 0.0
        %872 = vmatpush1.msra.mxu0 %v857
        %873 = vmatprep.subr.mxu0 0.0
        %874 = vmatpush1.msra.mxu0 0.0
        %875 = vmatprep.subr.mxu0 0.0
        %876 = vmatpush1.msra.mxu0 0.0
        %877 = vmatprep.subr.mxu0 0.0
        %878 = vmatpush1.msra.mxu0 0.0
        %879 = vmatprep.subr.mxu0 0.0
        %880 = vmatpush1.msra.mxu0 0.0
        %881 = vmatprep.subr.mxu0 0.0
        %882 = vmatpush1.msra.mxu0 0.0
        %883 = vmatprep.subr.mxu0 0.0
        %884 = vmatpush1.msra.mxu0 0.0
        %885 = vmatprep.subr.mxu0 0.0
        %886 = vmatpush1.msra.mxu0 0.0
        %887 = vmatprep.subr.mxu0 0.0
        %888 = vmatpush1.msra.mxu0 0.0
        %889 = vmatprep.subr.mxu0 0.0
        %890 = vmatpush1.msra.mxu0 0.0
        %891 = vmatprep.subr.mxu0 0.0
        %892 = vmatpush1.msra.mxu0 0.0
        %893 = vmatprep.subr.mxu0 0.0
        %894 = vmatpush1.msra.mxu0 0.0
        %895 = vmatprep.subr.mxu0 0.0
        %896 = vmatpush1.msra.mxu0 0.0
        %897 = vmatprep.subr.mxu0 0.0
        %898 = vmatpush1.msra.mxu0 0.0
        %899 = vmatprep.subr.mxu0 0.0
        %900 = vmatpush1.msra.mxu0 0.0
        %901 = vmatprep.subr.mxu0 0.0
        %902 = vmatpush1.msra.mxu0 0.0
        %903 = vmatprep.subr.mxu0 0.0
        %904 = vmatpush1.msra.mxu0 0.0
        %905 = vmatprep.subr.mxu0 0.0
        %906 = vmatpush1.msra.mxu0 0.0
        %907 = vmatprep.subr.mxu0 0.0
        %908 = vmatpush1.msra.mxu0 0.0
        %909 = vmatprep.subr.mxu0 0.0
        %910 = vmatpush1.msra.mxu0 0.0
        %911 = vmatprep.subr.mxu0 0.0
        %912 = vmatpush1.msra.mxu0 0.0
        %913 = vmatprep.subr.mxu0 0.0
        %914 = vmatpush1.msra.mxu0 0.0
        %915 = vmatprep.subr.mxu0 0.0
        %916 = vmatpush1.msra.mxu0 0.0
        %917 = vmatprep.subr.mxu0 0.0
        %918 = vmatpush1.msra.mxu0 0.0
        %919 = vmatprep.subr.mxu0 0.0
        %920 = vmatpush1.msra.mxu0 0.0
        %921 = vmatprep.subr.mxu0 0.0
        %922 = vmatpush1.msra.mxu0 0.0
        %923 = vmatprep.subr.mxu0 0.0
        %924 = vmatpush1.msra.mxu0 0.0
        %925 = vmatprep.subr.mxu0 0.0
        %926 = vmatpush1.msra.mxu0 0.0
        %927 = vmatprep.subr.mxu0 0.0
        %928 = vmatpush1.msra.mxu0 0.0
        %929 = vmatprep.mubr.f32.mxu0 0.0
        %930 = vmatmul.mubr.f32.gmra.mrb[0].mxu0 %v863
        %v931 = vpop.f32.mrb[0].mxu0
        %v932 = vadd.f32 %v861, %v931
        %v933 = vpop.f32.mrb[0].mxu0
        %934 = vdwg.mxu0
        %v935 = vadd.f32 %v932, %v426
        %v936 = vsel %vm402, %v935, 0.0
        %937 = vadd.xlane.f32.xlu0 %v936
        %v938 = vpop.xlane.xlu0 %937
        %v939 = vmul.f32 %v938, %v406
        %v940 = vsub.f32 %v935, %v939
        %v941 = vmul.f32 %v940, %v940
        %v942 = vsel %vm402, %v941, 0.0
        %943 = vadd.xlane.f32.xlu0 %v942
        %v944 = vpop.xlane.xlu0 %943
        %v945 = vmul.f32 %v944, %v406
        %v946 = vadd.f32 %v945, 1e-05
        %v947 = vrsqrt.pop %v946
        %v948 = vmul.f32 %v940, %v947
        %v949 = vlaneseq
        %v950 = vshrl.u32 %v949, 7
        %v951 = vsub.s32 4, %v950
        %v952 = vrot.slane %v432, %v951
        %v953 = vmul.f32 %v948, %v952
        %v954 = vlaneseq
        %v955 = vshrl.u32 %v954, 7
        %v956 = vsub.s32 5, %v955
        %v957 = vrot.slane %v432, %v956
        %v958 = vadd.f32 %v953, %v957
        %v959 = vld [vmem:[%s4] sm:$0xff]
        %v960 = vld [vmem:[%s4 + $0x8] sm:$0xff]
        %v961 = vld [vmem:[%s4 + $0x10] sm:$0xff]
        %v962 = vld [vmem:[%s4 + $0x18] sm:$0xff]
        %v963 = vlaneseq
        %v964 = vshrl.u32 %v963, 7
        %v965 = vsub.s32 2, %v964
        %v966 = vrot.slane %v432, %v965
        %v968 = vsel %vm402, %v958, 0
        %970 = vmatprep.subr.mxu0 0.0
        %971 = vmatpush1.msra.mxu0 %v959
        %972 = vmatprep.subr.mxu0 0.0
        %973 = vmatpush1.msra.mxu0 %v960
        %974 = vmatprep.subr.mxu0 0.0
        %975 = vmatpush1.msra.mxu0 %v961
        %976 = vmatprep.subr.mxu0 0.0
        %977 = vmatpush1.msra.mxu0 %v962
        %978 = vmatprep.subr.mxu0 0.0
        %979 = vmatpush1.msra.mxu0 0.0
        %980 = vmatprep.subr.mxu0 0.0
        %981 = vmatpush1.msra.mxu0 0.0
        %982 = vmatprep.subr.mxu0 0.0
        %983 = vmatpush1.msra.mxu0 0.0
        %984 = vmatprep.subr.mxu0 0.0
        %985 = vmatpush1.msra.mxu0 0.0
        %986 = vmatprep.subr.mxu0 0.0
        %987 = vmatpush1.msra.mxu0 0.0
        %988 = vmatprep.subr.mxu0 0.0
        %989 = vmatpush1.msra.mxu0 0.0
        %990 = vmatprep.subr.mxu0 0.0
        %991 = vmatpush1.msra.mxu0 0.0
        %992 = vmatprep.subr.mxu0 0.0
        %993 = vmatpush1.msra.mxu0 0.0
        %994 = vmatprep.subr.mxu0 0.0
        %995 = vmatpush1.msra.mxu0 0.0
        %996 = vmatprep.subr.mxu0 0.0
        %997 = vmatpush1.msra.mxu0 0.0
        %998 = vmatprep.subr.mxu0 0.0
        %999 = vmatpush1.msra.mxu0 0.0
        %1000 = vmatprep.subr.mxu0 0.0
        %1001 = vmatpush1.msra.mxu0 0.0
        %1002 = vmatprep.subr.mxu0 0.0
        %1003 = vmatpush1.msra.mxu0 0.0
        %1004 = vmatprep.subr.mxu0 0.0
        %1005 = vmatpush1.msra.mxu0 0.0
        %1006 = vmatprep.subr.mxu0 0.0
        %1007 = vmatpush1.msra.mxu0 0.0
        %1008 = vmatprep.subr.mxu0 0.0
        %1009 = vmatpush1.msra.mxu0 0.0
        %1010 = vmatprep.subr.mxu0 0.0
        %1011 = vmatpush1.msra.mxu0 0.0
        %1012 = vmatprep.subr.mxu0 0.0
        %1013 = vmatpush1.msra.mxu0 0.0
        %1014 = vmatprep.subr.mxu0 0.0
        %1015 = vmatpush1.msra.mxu0 0.0
        %1016 = vmatprep.subr.mxu0 0.0
        %1017 = vmatpush1.msra.mxu0 0.0
        %1018 = vmatprep.subr.mxu0 0.0
        %1019 = vmatpush1.msra.mxu0 0.0
        %1020 = vmatprep.subr.mxu0 0.0
        %1021 = vmatpush1.msra.mxu0 0.0
        %1022 = vmatprep.subr.mxu0 0.0
        %1023 = vmatpush1.msra.mxu0 0.0
        %1024 = vmatprep.subr.mxu0 0.0
        %1025 = vmatpush1.msra.mxu0 0.0
        %1026 = vmatprep.subr.mxu0 0.0
        %1027 = vmatpush1.msra.mxu0 0.0
        %1028 = vmatprep.subr.mxu0 0.0
        %1029 = vmatpush1.msra.mxu0 0.0
        %1030 = vmatprep.subr.mxu0 0.0
        %1031 = vmatpush1.msra.mxu0 0.0
        %1032 = vmatprep.subr.mxu0 0.0
        %1033 = vmatpush1.msra.mxu0 0.0
        %1034 = vmatprep.mubr.f32.mxu0 0.0
        %1035 = vmatmul.mubr.f32.gmra.mrb[0].mxu0 %v968
        %v1036 = vpop.f32.mrb[0].mxu0
        %v1037 = vadd.f32 %v966, %v1036
        %v1038 = vpop.f32.mrb[0].mxu0
        %1039 = vdwg.mxu0
        %v1040 = vmul.f32 %v1037, 0.5
        %v1041 = vmul.f32 %v1037, 0.044715
        %v1042 = vmul.f32 %v1041, %v1037
        %v1043 = vmul.f32 %v1042, %v1037
        %v1044 = vadd.f32 %v1037, %v1043
        %v1045 = vmul.f32 %v1044, 0.7978845
        %v1046 = vtanh.pop %v1045
        %v1047 = vadd.f32 %v1046, 1.0
        %v1048 = vmul.f32 %v1040, %v1047
        %v1049 = vld [vmem:[%s5] sm:$0xff]
        %v1050 = vld [vmem:[%s5 + $0x8] sm:$0xff]
        %v1051 = vld [vmem:[%s5 + $0x10] sm:$0xff]
        %v1052 = vld [vmem:[%s5 + $0x18] sm:$0xff]
        %v1053 = vld [vmem:[%s5 + $0x20] sm:$0xff]
        %v1054 = vld [vmem:[%s5 + $0x28] sm:$0xff]
        %v1055 = vld [vmem:[%s5 + $0x30] sm:$0xff]
        %v1056 = vld [vmem:[%s5 + $0x38] sm:$0xff]
        %v1057 = vlaneseq
        %v1058 = vshrl.u32 %v1057, 7
        %v1059 = vsub.s32 3, %v1058
        %v1060 = vrot.slane %v432, %v1059
        %vm1061 = vcmask 523264
        %v1063 = vsel %vm1061, %v1048, 0
        %1065 = vmatprep.subr.mxu0 0.0
        %1066 = vmatpush1.msra.mxu0 %v1049
        %1067 = vmatprep.subr.mxu0 0.0
        %1068 = vmatpush1.msra.mxu0 %v1050
        %1069 = vmatprep.subr.mxu0 0.0
        %1070 = vmatpush1.msra.mxu0 %v1051
        %1071 = vmatprep.subr.mxu0 0.0
        %1072 = vmatpush1.msra.mxu0 %v1052
        %1073 = vmatprep.subr.mxu0 0.0
        %1074 = vmatpush1.msra.mxu0 %v1053
        %1075 = vmatprep.subr.mxu0 0.0
        %1076 = vmatpush1.msra.mxu0 %v1054
        %1077 = vmatprep.subr.mxu0 0.0
        %1078 = vmatpush1.msra.mxu0 %v1055
        %1079 = vmatprep.subr.mxu0 0.0
        %1080 = vmatpush1.msra.mxu0 %v1056
        %1081 = vmatprep.subr.mxu0 0.0
        %1082 = vmatpush1.msra.mxu0 0.0
        %1083 = vmatprep.subr.mxu0 0.0
        %1084 = vmatpush1.msra.mxu0 0.0
        %1085 = vmatprep.subr.mxu0 0.0
        %1086 = vmatpush1.msra.mxu0 0.0
        %1087 = vmatprep.subr.mxu0 0.0
        %1088 = vmatpush1.msra.mxu0 0.0
        %1089 = vmatprep.subr.mxu0 0.0
        %1090 = vmatpush1.msra.mxu0 0.0
        %1091 = vmatprep.subr.mxu0 0.0
        %1092 = vmatpush1.msra.mxu0 0.0
        %1093 = vmatprep.subr.mxu0 0.0
        %1094 = vmatpush1.msra.mxu0 0.0
        %1095 = vmatprep.subr.mxu0 0.0
        %1096 = vmatpush1.msra.mxu0 0.0
        %1097 = vmatprep.subr.mxu0 0.0
        %1098 = vmatpush1.msra.mxu0 0.0
        %1099 = vmatprep.subr.mxu0 0.0
        %1100 = vmatpush1.msra.mxu0 0.0
        %1101 = vmatprep.subr.mxu0 0.0
        %1102 = vmatpush1.msra.mxu0 0.0
        %1103 = vmatprep.subr.mxu0 0.0
        %1104 = vmatpush1.msra.mxu0 0.0
        %1105 = vmatprep.subr.mxu0 0.0
        %1106 = vmatpush1.msra.mxu0 0.0
        %1107 = vmatprep.subr.mxu0 0.0
        %1108 = vmatpush1.msra.mxu0 0.0
        %1109 = vmatprep.subr.mxu0 0.0
        %1110 = vmatpush1.msra.mxu0 0.0
        %1111 = vmatprep.subr.mxu0 0.0
        %1112 = vmatpush1.msra.mxu0 0.0
        %1113 = vmatprep.subr.mxu0 0.0
        %1114 = vmatpush1.msra.mxu0 0.0
        %1115 = vmatprep.subr.mxu0 0.0
        %1116 = vmatpush1.msra.mxu0 0.0
        %1117 = vmatprep.subr.mxu0 0.0
        %1118 = vmatpush1.msra.mxu0 0.0
        %1119 = vmatprep.subr.mxu0 0.0
        %1120 = vmatpush1.msra.mxu0 0.0
        %1121 = vmatprep.subr.mxu0 0.0
        %1122 = vmatpush1.msra.mxu0 0.0
        %1123 = vmatprep.subr.mxu0 0.0
        %1124 = vmatpush1.msra.mxu0 0.0
        %1125 = vmatprep.subr.mxu0 0.0
        %1126 = vmatpush1.msra.mxu0 0.0
        %1127 = vmatprep.subr.mxu0 0.0
        %1128 = vmatpush1.msra.mxu0 0.0
        %1129 = vmatprep.mubr.f32.mxu0 0.0
        %1130 = vmatmul.mubr.f32.gmra.mrb[0].mxu0 %v1063
        %v1131 = vpop.f32.mrb[0].mxu0
        %v1132 = vadd.f32 %v1060, %v1131
        %v1133 = vpop.f32.mrb[0].mxu0
        %1134 = vdwg.mxu0
        %v1135 = vadd.f32 %v1132, %v958
        %v1136 = vsel %vm402, %v1135, 0.0
        %1137 = vadd.xlane.f32.xlu0 %v1136
        %v1138 = vpop.xlane.xlu0 %1137
        %v1139 = vmul.f32 %v1138, %v406
        %v1140 = vsub.f32 %v1135, %v1139
        %v1141 = vmul.f32 %v1140, %v1140
        %v1142 = vsel %vm402, %v1141, 0.0
        %1143 = vadd.xlane.f32.xlu0 %v1142
        %v1144 = vpop.xlane.xlu0 %1143
        %v1145 = vmul.f32 %v1144, %v406
        %v1146 = vadd.f32 %v1145, 1e-05
        %v1147 = vrsqrt.pop %v1146
        %v1148 = vmul.f32 %v1140, %v1147
        %v1149 = vlaneseq
        %v1150 = vshrl.u32 %v1149, 7
        %v1151 = vsub.s32 6, %v1150
        %v1152 = vrot.slane %v432, %v1151
        %v1153 = vmul.f32 %v1148, %v1152
        %v1154 = vlaneseq
        %v1155 = vshrl.u32 %v1154, 7
        %v1156 = vsub.s32 7, %v1155
        %v1157 = vrot.slane %v432, %v1156
        %v1158 = vadd.f32 %v1153, %v1157
        %s1159 = scalar_lea.vmem %s6, 8
        %v1160 = vld [vmem:[%s1159] sm:$0xff]
        %s1161 = scalar_lea.vmem %s2, 32
        %v1162 = vld [vmem:[%s1161] sm:$0xff]
        %v1163 = vld [vmem:[%s1161 + $0x8] sm:$0xff]
        %v1164 = vld [vmem:[%s1161 + $0x10] sm:$0xff]
        %v1165 = vld [vmem:[%s1161 + $0x18] sm:$0xff]
        %v1166 = vlaneseq
        %v1167 = vshrl.u32 %v1166, 7
        %v1168 = vsub.s32 0, %v1167
        %v1169 = vrot.slane %v1160, %v1168
        %v1171 = vsel %vm402, %v1158, 0
        %1173 = vmatprep.subr.mxu0 0.0
        %1174 = vmatpush1.msra.mxu0 %v1162
        %1175 = vmatprep.subr.mxu0 0.0
        %1176 = vmatpush1.msra.mxu0 %v1163
        %1177 = vmatprep.subr.mxu0 0.0
        %1178 = vmatpush1.msra.mxu0 %v1164
        %1179 = vmatprep.subr.mxu0 0.0
        %1180 = vmatpush1.msra.mxu0 %v1165
        %1181 = vmatprep.subr.mxu0 0.0
        %1182 = vmatpush1.msra.mxu0 0.0
        %1183 = vmatprep.subr.mxu0 0.0
        %1184 = vmatpush1.msra.mxu0 0.0
        %1185 = vmatprep.subr.mxu0 0.0
        %1186 = vmatpush1.msra.mxu0 0.0
        %1187 = vmatprep.subr.mxu0 0.0
        %1188 = vmatpush1.msra.mxu0 0.0
        %1189 = vmatprep.subr.mxu0 0.0
        %1190 = vmatpush1.msra.mxu0 0.0
        %1191 = vmatprep.subr.mxu0 0.0
        %1192 = vmatpush1.msra.mxu0 0.0
        %1193 = vmatprep.subr.mxu0 0.0
        %1194 = vmatpush1.msra.mxu0 0.0
        %1195 = vmatprep.subr.mxu0 0.0
        %1196 = vmatpush1.msra.mxu0 0.0
        %1197 = vmatprep.subr.mxu0 0.0
        %1198 = vmatpush1.msra.mxu0 0.0
        %1199 = vmatprep.subr.mxu0 0.0
        %1200 = vmatpush1.msra.mxu0 0.0
        %1201 = vmatprep.subr.mxu0 0.0
        %1202 = vmatpush1.msra.mxu0 0.0
        %1203 = vmatprep.subr.mxu0 0.0
        %1204 = vmatpush1.msra.mxu0 0.0
        %1205 = vmatprep.subr.mxu0 0.0
        %1206 = vmatpush1.msra.mxu0 0.0
        %1207 = vmatprep.subr.mxu0 0.0
        %1208 = vmatpush1.msra.mxu0 0.0
        %1209 = vmatprep.subr.mxu0 0.0
        %1210 = vmatpush1.msra.mxu0 0.0
        %1211 = vmatprep.subr.mxu0 0.0
        %1212 = vmatpush1.msra.mxu0 0.0
        %1213 = vmatprep.subr.mxu0 0.0
        %1214 = vmatpush1.msra.mxu0 0.0
        %1215 = vmatprep.subr.mxu0 0.0
        %1216 = vmatpush1.msra.mxu0 0.0
        %1217 = vmatprep.subr.mxu0 0.0
        %1218 = vmatpush1.msra.mxu0 0.0
        %1219 = vmatprep.subr.mxu0 0.0
        %1220 = vmatpush1.msra.mxu0 0.0
        %1221 = vmatprep.subr.mxu0 0.0
        %1222 = vmatpush1.msra.mxu0 0.0
        %1223 = vmatprep.subr.mxu0 0.0
        %1224 = vmatpush1.msra.mxu0 0.0
        %1225 = vmatprep.subr.mxu0 0.0
        %1226 = vmatpush1.msra.mxu0 0.0
        %1227 = vmatprep.subr.mxu0 0.0
        %1228 = vmatpush1.msra.mxu0 0.0
        %1229 = vmatprep.subr.mxu0 0.0
        %1230 = vmatpush1.msra.mxu0 0.0
        %1231 = vmatprep.subr.mxu0 0.0
        %1232 = vmatpush1.msra.mxu0 0.0
        %1233 = vmatprep.subr.mxu0 0.0
        %1234 = vmatpush1.msra.mxu0 0.0
        %1235 = vmatprep.subr.mxu0 0.0
        %1236 = vmatpush1.msra.mxu0 0.0
        %1237 = vmatprep.mubr.f32.mxu0 0.0
        %1238 = vmatmul.mubr.f32.gmra.mrb[0].mxu0 %v1171
        %v1239 = vpop.f32.mrb[0].mxu0
        %v1240 = vadd.f32 %v1169, %v1239
        %v1241 = vpop.f32.mrb[0].mxu0
        %1242 = vdwg.mxu0
        %1244 = vrot.lane.b32.xlu0 %v1240, 96
        %v1245 = vpop.permute.xlu0 %1244
        %v1246 = vsel %vm521, %v1240, 0
        %v1248 = vsel %vm521, %v1245, 0
        %1250 = vmatprep.subr.mxu0 0.0
        %1251 = vmatpush1.xpose.msra.mxu0 %v1248
        %1252 = vmatprep.subr.mxu0 0.0
        %1253 = vmatpush1.xpose.msra.mxu0 0.0
        %1254 = vmatprep.subr.mxu0 0.0
        %1255 = vmatpush1.xpose.msra.mxu0 0.0
        %1256 = vmatprep.subr.mxu0 0.0
        %1257 = vmatpush1.xpose.msra.mxu0 0.0
        %1258 = vmatprep.subr.mxu0 0.0
        %1259 = vmatpush1.xpose.msra.mxu0 0.0
        %1260 = vmatprep.subr.mxu0 0.0
        %1261 = vmatpush1.xpose.msra.mxu0 0.0
        %1262 = vmatprep.subr.mxu0 0.0
        %1263 = vmatpush1.xpose.msra.mxu0 0.0
        %1264 = vmatprep.subr.mxu0 0.0
        %1265 = vmatpush1.xpose.msra.mxu0 0.0
        %1266 = vmatprep.subr.mxu0 0.0
        %1267 = vmatpush1.xpose.msra.mxu0 0.0
        %1268 = vmatprep.subr.mxu0 0.0
        %1269 = vmatpush1.xpose.msra.mxu0 0.0
        %1270 = vmatprep.subr.mxu0 0.0
        %1271 = vmatpush1.xpose.msra.mxu0 0.0
        %1272 = vmatprep.subr.mxu0 0.0
        %1273 = vmatpush1.xpose.msra.mxu0 0.0
        %1274 = vmatprep.subr.mxu0 0.0
        %1275 = vmatpush1.xpose.msra.mxu0 0.0
        %1276 = vmatprep.subr.mxu0 0.0
        %1277 = vmatpush1.xpose.msra.mxu0 0.0
        %1278 = vmatprep.subr.mxu0 0.0
        %1279 = vmatpush1.xpose.msra.mxu0 0.0
        %1280 = vmatprep.subr.mxu0 0.0
        %1281 = vmatpush1.xpose.msra.mxu0 0.0
        %1282 = vmatprep.subr.mxu0 0.0
        %1283 = vmatpush1.xpose.msra.mxu0 0.0
        %1284 = vmatprep.subr.mxu0 0.0
        %1285 = vmatpush1.xpose.msra.mxu0 0.0
        %1286 = vmatprep.subr.mxu0 0.0
        %1287 = vmatpush1.xpose.msra.mxu0 0.0
        %1288 = vmatprep.subr.mxu0 0.0
        %1289 = vmatpush1.xpose.msra.mxu0 0.0
        %1290 = vmatprep.subr.mxu0 0.0
        %1291 = vmatpush1.xpose.msra.mxu0 0.0
        %1292 = vmatprep.subr.mxu0 0.0
        %1293 = vmatpush1.xpose.msra.mxu0 0.0
        %1294 = vmatprep.subr.mxu0 0.0
        %1295 = vmatpush1.xpose.msra.mxu0 0.0
        %1296 = vmatprep.subr.mxu0 0.0
        %1297 = vmatpush1.xpose.msra.mxu0 0.0
        %1298 = vmatprep.subr.mxu0 0.0
        %1299 = vmatpush1.xpose.msra.mxu0 0.0
        %1300 = vmatprep.subr.mxu0 0.0
        %1301 = vmatpush1.xpose.msra.mxu0 0.0
        %1302 = vmatprep.subr.mxu0 0.0
        %1303 = vmatpush1.xpose.msra.mxu0 0.0
        %1304 = vmatprep.subr.mxu0 0.0
        %1305 = vmatpush1.xpose.msra.mxu0 0.0
        %1306 = vmatprep.subr.mxu0 0.0
        %1307 = vmatpush1.xpose.msra.mxu0 0.0
        %1308 = vmatprep.subr.mxu0 0.0
        %1309 = vmatpush1.xpose.msra.mxu0 0.0
        %1310 = vmatprep.subr.mxu0 0.0
        %1311 = vmatpush1.xpose.msra.mxu0 0.0
        %1312 = vmatprep.subr.mxu0 0.0
        %1313 = vmatpush1.xpose.msra.mxu0 0.0
        %1314 = vmatprep.mubr.f32.mxu0 0.0
        %1315 = vmatmul.mubr.f32.gmra.mrb[0].mxu0 %v1246
        %v1316 = vpop.f32.mrb[0].mxu0
        %v1317 = vadd.f32 %v517, %v1316
        %v1318 = vpop.f32.mrb[0].mxu0
        %1319 = vdwg.mxu0
        %v1320 = vsel %vm596, %v1317, -inf
        %1321 = vmax.xlane.f32.xlu0 %v1320
        %v1322 = vpop.xlane.xlu0 %1321
        %v1323 = vsub.f32 %v1317, %v1322
        %v1324 = vmul.f32 %v1323, 1.442695
        %v1325 = vpow.pop %v1324
        %v1326 = vsel %vm596, %v1325, 0.0
        %1327 = vadd.xlane.f32.xlu0 %v1326
        %v1328 = vpop.xlane.xlu0 %1327
        %v1329 = vrcp.pop %v1328
        %v1330 = vmul.f32 %v1325, %v1329
        %1331 = vrot.lane.b32.xlu0 %v1240, 64
        %v1332 = vpop.permute.xlu0 %1331
        %v1335 = vsel %vm596, %v1330, 0
        %1337 = vmatprep.subr.mxu0 0.0
        %1338 = vmatpush1.msra.mxu0 %v1332
        %1339 = vmatprep.subr.mxu0 0.0
        %1340 = vmatpush1.msra.mxu0 0.0
        %1341 = vmatprep.subr.mxu0 0.0
        %1342 = vmatpush1.msra.mxu0 0.0
        %1343 = vmatprep.subr.mxu0 0.0
        %1344 = vmatpush1.msra.mxu0 0.0
        %1345 = vmatprep.subr.mxu0 0.0
        %1346 = vmatpush1.msra.mxu0 0.0
        %1347 = vmatprep.subr.mxu0 0.0
        %1348 = vmatpush1.msra.mxu0 0.0
        %1349 = vmatprep.subr.mxu0 0.0
        %1350 = vmatpush1.msra.mxu0 0.0
        %1351 = vmatprep.subr.mxu0 0.0
        %1352 = vmatpush1.msra.mxu0 0.0
        %1353 = vmatprep.subr.mxu0 0.0
        %1354 = vmatpush1.msra.mxu0 0.0
        %1355 = vmatprep.subr.mxu0 0.0
        %1356 = vmatpush1.msra.mxu0 0.0
        %1357 = vmatprep.subr.mxu0 0.0
        %1358 = vmatpush1.msra.mxu0 0.0
        %1359 = vmatprep.subr.mxu0 0.0
        %1360 = vmatpush1.msra.mxu0 0.0
        %1361 = vmatprep.subr.mxu0 0.0
        %1362 = vmatpush1.msra.mxu0 0.0
        %1363 = vmatprep.subr.mxu0 0.0
        %1364 = vmatpush1.msra.mxu0 0.0
        %1365 = vmatprep.subr.mxu0 0.0
        %1366 = vmatpush1.msra.mxu0 0.0
        %1367 = vmatprep.subr.mxu0 0.0
        %1368 = vmatpush1.msra.mxu0 0.0
        %1369 = vmatprep.subr.mxu0 0.0
        %1370 = vmatpush1.msra.mxu0 0.0
        %1371 = vmatprep.subr.mxu0 0.0
        %1372 = vmatpush1.msra.mxu0 0.0
        %1373 = vmatprep.subr.mxu0 0.0
        %1374 = vmatpush1.msra.mxu0 0.0
        %1375 = vmatprep.subr.mxu0 0.0
        %1376 = vmatpush1.msra.mxu0 0.0
        %1377 = vmatprep.subr.mxu0 0.0
        %1378 = vmatpush1.msra.mxu0 0.0
        %1379 = vmatprep.subr.mxu0 0.0
        %1380 = vmatpush1.msra.mxu0 0.0
        %1381 = vmatprep.subr.mxu0 0.0
        %1382 = vmatpush1.msra.mxu0 0.0
        %1383 = vmatprep.subr.mxu0 0.0
        %1384 = vmatpush1.msra.mxu0 0.0
        %1385 = vmatprep.subr.mxu0 0.0
        %1386 = vmatpush1.msra.mxu0 0.0
        %1387 = vmatprep.subr.mxu0 0.0
        %1388 = vmatpush1.msra.mxu0 0.0
        %1389 = vmatprep.subr.mxu0 0.0
        %1390 = vmatpush1.msra.mxu0 0.0
        %1391 = vmatprep.subr.mxu0 0.0
        %1392 = vmatpush1.msra.mxu0 0.0
        %1393 = vmatprep.subr.mxu0 0.0
        %1394 = vmatpush1.msra.mxu0 0.0
        %1395 = vmatprep.subr.mxu0 0.0
        %1396 = vmatpush1.msra.mxu0 0.0
        %1397 = vmatprep.subr.mxu0 0.0
        %1398 = vmatpush1.msra.mxu0 0.0
        %1399 = vmatprep.subr.mxu0 0.0
        %1400 = vmatpush1.msra.mxu0 0.0
        %1401 = vmatprep.mubr.f32.mxu0 0.0
        %1402 = vmatmul.mubr.f32.gmra.mrb[0].mxu0 %v1335
        %v1403 = vpop.f32.mrb[0].mxu0
        %v1404 = vadd.f32 0.0, %v1403
        %v1405 = vpop.f32.mrb[0].mxu0
        %1406 = vdwg.mxu0
        %1407 = vrot.lane.b32.xlu0 %v1240, 112
        %v1408 = vpop.permute.xlu0 %1407
        %1409 = vrot.lane.b32.xlu0 %v1240, 80
        %v1410 = vpop.permute.xlu0 %1409
        %v1411 = vsel %vm521, %v1408, 0
        %v1413 = vsel %vm521, %v1410, 0
        %1415 = vmatprep.subr.mxu0 0.0
        %1416 = vmatpush1.xpose.msra.mxu0 %v1413
        %1417 = vmatprep.subr.mxu0 0.0
        %1418 = vmatpush1.xpose.msra.mxu0 0.0
        %1419 = vmatprep.subr.mxu0 0.0
        %1420 = vmatpush1.xpose.msra.mxu0 0.0
        %1421 = vmatprep.subr.mxu0 0.0
        %1422 = vmatpush1.xpose.msra.mxu0 0.0
        %1423 = vmatprep.subr.mxu0 0.0
        %1424 = vmatpush1.xpose.msra.mxu0 0.0
        %1425 = vmatprep.subr.mxu0 0.0
        %1426 = vmatpush1.xpose.msra.mxu0 0.0
        %1427 = vmatprep.subr.mxu0 0.0
        %1428 = vmatpush1.xpose.msra.mxu0 0.0
        %1429 = vmatprep.subr.mxu0 0.0
        %1430 = vmatpush1.xpose.msra.mxu0 0.0
        %1431 = vmatprep.subr.mxu0 0.0
        %1432 = vmatpush1.xpose.msra.mxu0 0.0
        %1433 = vmatprep.subr.mxu0 0.0
        %1434 = vmatpush1.xpose.msra.mxu0 0.0
        %1435 = vmatprep.subr.mxu0 0.0
        %1436 = vmatpush1.xpose.msra.mxu0 0.0
        %1437 = vmatprep.subr.mxu0 0.0
        %1438 = vmatpush1.xpose.msra.mxu0 0.0
        %1439 = vmatprep.subr.mxu0 0.0
        %1440 = vmatpush1.xpose.msra.mxu0 0.0
        %1441 = vmatprep.subr.mxu0 0.0
        %1442 = vmatpush1.xpose.msra.mxu0 0.0
        %1443 = vmatprep.subr.mxu0 0.0
        %1444 = vmatpush1.xpose.msra.mxu0 0.0
        %1445 = vmatprep.subr.mxu0 0.0
        %1446 = vmatpush1.xpose.msra.mxu0 0.0
        %1447 = vmatprep.subr.mxu0 0.0
        %1448 = vmatpush1.xpose.msra.mxu0 0.0
        %1449 = vmatprep.subr.mxu0 0.0
        %1450 = vmatpush1.xpose.msra.mxu0 0.0
        %1451 = vmatprep.subr.mxu0 0.0
        %1452 = vmatpush1.xpose.msra.mxu0 0.0
        %1453 = vmatprep.subr.mxu0 0.0
        %1454 = vmatpush1.xpose.msra.mxu0 0.0
        %1455 = vmatprep.subr.mxu0 0.0
        %1456 = vmatpush1.xpose.msra.mxu0 0.0
        %1457 = vmatprep.subr.mxu0 0.0
        %1458 = vmatpush1.xpose.msra.mxu0 0.0
        %1459 = vmatprep.subr.mxu0 0.0
        %1460 = vmatpush1.xpose.msra.mxu0 0.0
        %1461 = vmatprep.subr.mxu0 0.0
        %1462 = vmatpush1.xpose.msra.mxu0 0.0
        %1463 = vmatprep.subr.mxu0 0.0
        %1464 = vmatpush1.xpose.msra.mxu0 0.0
        %1465 = vmatprep.subr.mxu0 0.0
        %1466 = vmatpush1.xpose.msra.mxu0 0.0
        %1467 = vmatprep.subr.mxu0 0.0
        %1468 = vmatpush1.xpose.msra.mxu0 0.0
        %1469 = vmatprep.subr.mxu0 0.0
        %1470 = vmatpush1.xpose.msra.mxu0 0.0
        %1471 = vmatprep.subr.mxu0 0.0
        %1472 = vmatpush1.xpose.msra.mxu0 0.0
        %1473 = vmatprep.subr.mxu0 0.0
        %1474 = vmatpush1.xpose.msra.mxu0 0.0
        %1475 = vmatprep.subr.mxu0 0.0
        %1476 = vmatpush1.xpose.msra.mxu0 0.0
        %1477 = vmatprep.subr.mxu0 0.0
        %1478 = vmatpush1.xpose.msra.mxu0 0.0
        %1479 = vmatprep.mubr.f32.mxu0 0.0
        %1480 = vmatmul.mubr.f32.gmra.mrb[0].mxu0 %v1411
        %v1481 = vpop.f32.mrb[0].mxu0
        %v1482 = vadd.f32 %v517, %v1481
        %v1483 = vpop.f32.mrb[0].mxu0
        %1484 = vdwg.mxu0
        %v1485 = vsel %vm596, %v1482, -inf
        %1486 = vmax.xlane.f32.xlu0 %v1485
        %v1487 = vpop.xlane.xlu0 %1486
        %v1488 = vsub.f32 %v1482, %v1487
        %v1489 = vmul.f32 %v1488, 1.442695
        %v1490 = vpow.pop %v1489
        %v1491 = vsel %vm596, %v1490, 0.0
        %1492 = vadd.xlane.f32.xlu0 %v1491
        %v1493 = vpop.xlane.xlu0 %1492
        %v1494 = vrcp.pop %v1493
        %v1495 = vmul.f32 %v1490, %v1494
        %1496 = vrot.lane.b32.xlu0 %v1240, 48
        %v1497 = vpop.permute.xlu0 %1496
        %v1500 = vsel %vm596, %v1495, 0
        %1502 = vmatprep.subr.mxu0 0.0
        %1503 = vmatpush1.msra.mxu0 %v1497
        %1504 = vmatprep.subr.mxu0 0.0
        %1505 = vmatpush1.msra.mxu0 0.0
        %1506 = vmatprep.subr.mxu0 0.0
        %1507 = vmatpush1.msra.mxu0 0.0
        %1508 = vmatprep.subr.mxu0 0.0
        %1509 = vmatpush1.msra.mxu0 0.0
        %1510 = vmatprep.subr.mxu0 0.0
        %1511 = vmatpush1.msra.mxu0 0.0
        %1512 = vmatprep.subr.mxu0 0.0
        %1513 = vmatpush1.msra.mxu0 0.0
        %1514 = vmatprep.subr.mxu0 0.0
        %1515 = vmatpush1.msra.mxu0 0.0
        %1516 = vmatprep.subr.mxu0 0.0
        %1517 = vmatpush1.msra.mxu0 0.0
        %1518 = vmatprep.subr.mxu0 0.0
        %1519 = vmatpush1.msra.mxu0 0.0
        %1520 = vmatprep.subr.mxu0 0.0
        %1521 = vmatpush1.msra.mxu0 0.0
        %1522 = vmatprep.subr.mxu0 0.0
        %1523 = vmatpush1.msra.mxu0 0.0
        %1524 = vmatprep.subr.mxu0 0.0
        %1525 = vmatpush1.msra.mxu0 0.0
        %1526 = vmatprep.subr.mxu0 0.0
        %1527 = vmatpush1.msra.mxu0 0.0
        %1528 = vmatprep.subr.mxu0 0.0
        %1529 = vmatpush1.msra.mxu0 0.0
        %1530 = vmatprep.subr.mxu0 0.0
        %1531 = vmatpush1.msra.mxu0 0.0
        %1532 = vmatprep.subr.mxu0 0.0
        %1533 = vmatpush1.msra.mxu0 0.0
        %1534 = vmatprep.subr.mxu0 0.0
        %1535 = vmatpush1.msra.mxu0 0.0
        %1536 = vmatprep.subr.mxu0 0.0
        %1537 = vmatpush1.msra.mxu0 0.0
        %1538 = vmatprep.subr.mxu0 0.0
        %1539 = vmatpush1.msra.mxu0 0.0
        %1540 = vmatprep.subr.mxu0 0.0
        %1541 = vmatpush1.msra.mxu0 0.0
        %1542 = vmatprep.subr.mxu0 0.0
        %1543 = vmatpush1.msra.mxu0 0.0
        %1544 = vmatprep.subr.mxu0 0.0
        %1545 = vmatpush1.msra.mxu0 0.0
        %1546 = vmatprep.subr.mxu0 0.0
        %1547 = vmatpush1.msra.mxu0 0.0
        %1548 = vmatprep.subr.mxu0 0.0
        %1549 = vmatpush1.msra.mxu0 0.0
        %1550 = vmatprep.subr.mxu0 0.0
        %1551 = vmatpush1.msra.mxu0 0.0
        %1552 = vmatprep.subr.mxu0 0.0
        %1553 = vmatpush1.msra.mxu0 0.0
        %1554 = vmatprep.subr.mxu0 0.0
        %1555 = vmatpush1.msra.mxu0 0.0
        %1556 = vmatprep.subr.mxu0 0.0
        %1557 = vmatpush1.msra.mxu0 0.0
        %1558 = vmatprep.subr.mxu0 0.0
        %1559 = vmatpush1.msra.mxu0 0.0
        %1560 = vmatprep.subr.mxu0 0.0
        %1561 = vmatpush1.msra.mxu0 0.0
        %1562 = vmatprep.subr.mxu0 0.0
        %1563 = vmatpush1.msra.mxu0 0.0
        %1564 = vmatprep.subr.mxu0 0.0
        %1565 = vmatpush1.msra.mxu0 0.0
        %1566 = vmatprep.mubr.f32.mxu0 0.0
        %1567 = vmatmul.mubr.f32.gmra.mrb[0].mxu0 %v1500
        %v1568 = vpop.f32.mrb[0].mxu0
        %v1569 = vadd.f32 0.0, %v1568
        %v1570 = vpop.f32.mrb[0].mxu0
        %1571 = vdwg.mxu0
        %1573 = vrot.lane.b32.xlu0 %v1569, 16
        %v1574 = vpop.permute.xlu0 %1573
        %v1576 = vsel %vm521, %v1404, %v1574
        %s1577 = scalar_lea.vmem %s3, 32
        %v1578 = vld [vmem:[%s1577] sm:$0xff]
        %v1579 = vld [vmem:[%s1577 + $0x8] sm:$0xff]
        %v1580 = vld [vmem:[%s1577 + $0x10] sm:$0xff]
        %v1581 = vld [vmem:[%s1577 + $0x18] sm:$0xff]
        %v1582 = vlaneseq
        %v1583 = vshrl.u32 %v1582, 7
        %v1584 = vsub.s32 1, %v1583
        %v1585 = vrot.slane %v1160, %v1584
        %v1587 = vsel %vm402, %v1576, 0
        %1589 = vmatprep.subr.mxu0 0.0
        %1590 = vmatpush1.msra.mxu0 %v1578
        %1591 = vmatprep.subr.mxu0 0.0
        %1592 = vmatpush1.msra.mxu0 %v1579
        %1593 = vmatprep.subr.mxu0 0.0
        %1594 = vmatpush1.msra.mxu0 %v1580
        %1595 = vmatprep.subr.mxu0 0.0
        %1596 = vmatpush1.msra.mxu0 %v1581
        %1597 = vmatprep.subr.mxu0 0.0
        %1598 = vmatpush1.msra.mxu0 0.0
        %1599 = vmatprep.subr.mxu0 0.0
        %1600 = vmatpush1.msra.mxu0 0.0
        %1601 = vmatprep.subr.mxu0 0.0
        %1602 = vmatpush1.msra.mxu0 0.0
        %1603 = vmatprep.subr.mxu0 0.0
        %1604 = vmatpush1.msra.mxu0 0.0
        %1605 = vmatprep.subr.mxu0 0.0
        %1606 = vmatpush1.msra.mxu0 0.0
        %1607 = vmatprep.subr.mxu0 0.0
        %1608 = vmatpush1.msra.mxu0 0.0
        %1609 = vmatprep.subr.mxu0 0.0
        %1610 = vmatpush1.msra.mxu0 0.0
        %1611 = vmatprep.subr.mxu0 0.0
        %1612 = vmatpush1.msra.mxu0 0.0
        %1613 = vmatprep.subr.mxu0 0.0
        %1614 = vmatpush1.msra.mxu0 0.0
        %1615 = vmatprep.subr.mxu0 0.0
        %1616 = vmatpush1.msra.mxu0 0.0
        %1617 = vmatprep.subr.mxu0 0.0
        %1618 = vmatpush1.msra.mxu0 0.0
        %1619 = vmatprep.subr.mxu0 0.0
        %1620 = vmatpush1.msra.mxu0 0.0
        %1621 = vmatprep.subr.mxu0 0.0
        %1622 = vmatpush1.msra.mxu0 0.0
        %1623 = vmatprep.subr.mxu0 0.0
        %1624 = vmatpush1.msra.mxu0 0.0
        %1625 = vmatprep.subr.mxu0 0.0
        %1626 = vmatpush1.msra.mxu0 0.0
        %1627 = vmatprep.subr.mxu0 0.0
        %1628 = vmatpush1.msra.mxu0 0.0
        %1629 = vmatprep.subr.mxu0 0.0
        %1630 = vmatpush1.msra.mxu0 0.0
        %1631 = vmatprep.subr.mxu0 0.0
        %1632 = vmatpush1.msra.mxu0 0.0
        %1633 = vmatprep.subr.mxu0 0.0
        %1634 = vmatpush1.msra.mxu0 0.0
        %1635 = vmatprep.subr.mxu0 0.0
        %1636 = vmatpush1.msra.mxu0 0.0
        %1637 = vmatprep.subr.mxu0 0.0
        %1638 = vmatpush1.msra.mxu0 0.0
        %1639 = vmatprep.subr.mxu0 0.0
        %1640 = vmatpush1.msra.mxu0 0.0
        %1641 = vmatprep.subr.mxu0 0.0
        %1642 = vmatpush1.msra.mxu0 0.0
        %1643 = vmatprep.subr.mxu0 0.0
        %1644 = vmatpush1.msra.mxu0 0.0
        %1645 = vmatprep.subr.mxu0 0.0
        %1646 = vmatpush1.msra.mxu0 0.0
        %1647 = vmatprep.subr.mxu0 0.0
        %1648 = vmatpush1.msra.mxu0 0.0
        %1649 = vmatprep.subr.mxu0 0.0
        %1650 = vmatpush1.msra.mxu0 0.0
        %1651 = vmatprep.subr.mxu0 0.0
        %1652 = vmatpush1.msra.mxu0 0.0
        %1653 = vmatprep.mubr.f32.mxu0 0.0
        %1654 = vmatmul.mubr.f32.gmra.mrb[0].mxu0 %v1587
        %v1655 = vpop.f32.mrb[0].mxu0
        %v1656 = vadd.f32 %v1585, %v1655
        %v1657 = vpop.f32.mrb[0].mxu0
        %1658 = vdwg.mxu0
        %v1659 = vadd.f32 %v1656, %v1158
        %v1660 = vsel %vm402, %v1659, 0.0
        %1661 = vadd.xlane.f32.xlu0 %v1660
        %v1662 = vpop.xlane.xlu0 %1661
        %v1663 = vmul.f32 %v1662, %v406
        %v1664 = vsub.f32 %v1659, %v1663
        %v1665 = vmul.f32 %v1664, %v1664
        %v1666 = vsel %vm402, %v1665, 0.0
        %1667 = vadd.xlane.f32.xlu0 %v1666
        %v1668 = vpop.xlane.xlu0 %1667
        %v1669 = vmul.f32 %v1668, %v406
        %v1670 = vadd.f32 %v1669, 1e-05
        %v1671 = vrsqrt.pop %v1670
        %v1672 = vmul.f32 %v1664, %v1671
        %v1673 = vlaneseq
        %v1674 = vshrl.u32 %v1673, 7
        %v1675 = vsub.s32 4, %v1674
        %v1676 = vrot.slane %v1160, %v1675
        %v1677 = vmul.f32 %v1672, %v1676
        %v1678 = vlaneseq
        %v1679 = vshrl.u32 %v1678, 7
        %v1680 = vsub.s32 5, %v1679
        %v1681 = vrot.slane %v1160, %v1680
        %v1682 = vadd.f32 %v1677, %v1681
        %s1683 = scalar_lea.vmem %s4, 32
        %v1684 = vld [vmem:[%s1683] sm:$0xff]
        %v1685 = vld [vmem:[%s1683 + $0x8] sm:$0xff]
        %v1686 = vld [vmem:[%s1683 + $0x10] sm:$0xff]
        %v1687 = vld [vmem:[%s1683 + $0x18] sm:$0xff]
        %v1688 = vlaneseq
        %v1689 = vshrl.u32 %v1688, 7
        %v1690 = vsub.s32 2, %v1689
        %v1691 = vrot.slane %v1160, %v1690
        %v1693 = vsel %vm402, %v1682, 0
        %1695 = vmatprep.subr.mxu0 0.0
        %1696 = vmatpush1.msra.mxu0 %v1684
        %1697 = vmatprep.subr.mxu0 0.0
        %1698 = vmatpush1.msra.mxu0 %v1685
        %1699 = vmatprep.subr.mxu0 0.0
        %1700 = vmatpush1.msra.mxu0 %v1686
        %1701 = vmatprep.subr.mxu0 0.0
        %1702 = vmatpush1.msra.mxu0 %v1687
        %1703 = vmatprep.subr.mxu0 0.0
        %1704 = vmatpush1.msra.mxu0 0.0
        %1705 = vmatprep.subr.mxu0 0.0
        %1706 = vmatpush1.msra.mxu0 0.0
        %1707 = vmatprep.subr.mxu0 0.0
        %1708 = vmatpush1.msra.mxu0 0.0
        %1709 = vmatprep.subr.mxu0 0.0
        %1710 = vmatpush1.msra.mxu0 0.0
        %1711 = vmatprep.subr.mxu0 0.0
        %1712 = vmatpush1.msra.mxu0 0.0
        %1713 = vmatprep.subr.mxu0 0.0
        %1714 = vmatpush1.msra.mxu0 0.0
        %1715 = vmatprep.subr.mxu0 0.0
        %1716 = vmatpush1.msra.mxu0 0.0
        %1717 = vmatprep.subr.mxu0 0.0
        %1718 = vmatpush1.msra.mxu0 0.0
        %1719 = vmatprep.subr.mxu0 0.0
        %1720 = vmatpush1.msra.mxu0 0.0
        %1721 = vmatprep.subr.mxu0 0.0
        %1722 = vmatpush1.msra.mxu0 0.0
        %1723 = vmatprep.subr.mxu0 0.0
        %1724 = vmatpush1.msra.mxu0 0.0
        %1725 = vmatprep.subr.mxu0 0.0
        %1726 = vmatpush1.msra.mxu0 0.0
        %1727 = vmatprep.subr.mxu0 0.0
        %1728 = vmatpush1.msra.mxu0 0.0
        %1729 = vmatprep.subr.mxu0 0.0
        %1730 = vmatpush1.msra.mxu0 0.0
        %1731 = vmatprep.subr.mxu0 0.0
        %1732 = vmatpush1.msra.mxu0 0.0
        %1733 = vmatprep.subr.mxu0 0.0
        %1734 = vmatpush1.msra.mxu0 0.0
        %1735 = vmatprep.subr.mxu0 0.0
        %1736 = vmatpush1.msra.mxu0 0.0
        %1737 = vmatprep.subr.mxu0 0.0
        %1738 = vmatpush1.msra.mxu0 0.0
        %1739 = vmatprep.subr.mxu0 0.0
        %1740 = vmatpush1.msra.mxu0 0.0
        %1741 = vmatprep.subr.mxu0 0.0
        %1742 = vmatpush1.msra.mxu0 0.0
        %1743 = vmatprep.subr.mxu0 0.0
        %1744 = vmatpush1.msra.mxu0 0.0
        %1745 = vmatprep.subr.mxu0 0.0
        %1746 = vmatpush1.msra.mxu0 0.0
        %1747 = vmatprep.subr.mxu0 0.0
        %1748 = vmatpush1.msra.mxu0 0.0
        %1749 = vmatprep.subr.mxu0 0.0
        %1750 = vmatpush1.msra.mxu0 0.0
        %1751 = vmatprep.subr.mxu0 0.0
        %1752 = vmatpush1.msra.mxu0 0.0
        %1753 = vmatprep.subr.mxu0 0.0
        %1754 = vmatpush1.msra.mxu0 0.0
        %1755 = vmatprep.subr.mxu0 0.0
        %1756 = vmatpush1.msra.mxu0 0.0
        %1757 = vmatprep.subr.mxu0 0.0
        %1758 = vmatpush1.msra.mxu0 0.0
        %1759 = vmatprep.mubr.f32.mxu0 0.0
        %1760 = vmatmul.mubr.f32.gmra.mrb[0].mxu0 %v1693
        %v1761 = vpop.f32.mrb[0].mxu0
        %v1762 = vadd.f32 %v1691, %v1761
        %v1763 = vpop.f32.mrb[0].mxu0
        %1764 = vdwg.mxu0
        %v1765 = vmul.f32 %v1762, 0.5
        %v1766 = vmul.f32 %v1762, 0.044715
        %v1767 = vmul.f32 %v1766, %v1762
        %v1768 = vmul.f32 %v1767, %v1762
        %v1769 = vadd.f32 %v1762, %v1768
        %v1770 = vmul.f32 %v1769, 0.7978845
        %v1771 = vtanh.pop %v1770
        %v1772 = vadd.f32 %v1771, 1.0
        %v1773 = vmul.f32 %v1765, %v1772
        %s1774 = scalar_lea.vmem %s5, 64
        %v1775 = vld [vmem:[%s1774] sm:$0xff]
        %v1776 = vld [vmem:[%s1774 + $0x8] sm:$0xff]
        %v1777 = vld [vmem:[%s1774 + $0x10] sm:$0xff]
        %v1778 = vld [vmem:[%s1774 + $0x18] sm:$0xff]
        %v1779 = vld [vmem:[%s1774 + $0x20] sm:$0xff]
        %v1780 = vld [vmem:[%s1774 + $0x28] sm:$0xff]
        %v1781 = vld [vmem:[%s1774 + $0x30] sm:$0xff]
        %v1782 = vld [vmem:[%s1774 + $0x38] sm:$0xff]
        %v1783 = vlaneseq
        %v1784 = vshrl.u32 %v1783, 7
        %v1785 = vsub.s32 3, %v1784
        %v1786 = vrot.slane %v1160, %v1785
        %v1788 = vsel %vm1061, %v1773, 0
        %1790 = vmatprep.subr.mxu0 0.0
        %1791 = vmatpush1.msra.mxu0 %v1775
        %1792 = vmatprep.subr.mxu0 0.0
        %1793 = vmatpush1.msra.mxu0 %v1776
        %1794 = vmatprep.subr.mxu0 0.0
        %1795 = vmatpush1.msra.mxu0 %v1777
        %1796 = vmatprep.subr.mxu0 0.0
        %1797 = vmatpush1.msra.mxu0 %v1778
        %1798 = vmatprep.subr.mxu0 0.0
        %1799 = vmatpush1.msra.mxu0 %v1779
        %1800 = vmatprep.subr.mxu0 0.0
        %1801 = vmatpush1.msra.mxu0 %v1780
        %1802 = vmatprep.subr.mxu0 0.0
        %1803 = vmatpush1.msra.mxu0 %v1781
        %1804 = vmatprep.subr.mxu0 0.0
        %1805 = vmatpush1.msra.mxu0 %v1782
        %1806 = vmatprep.subr.mxu0 0.0
        %1807 = vmatpush1.msra.mxu0 0.0
        %1808 = vmatprep.subr.mxu0 0.0
        %1809 = vmatpush1.msra.mxu0 0.0
        %1810 = vmatprep.subr.mxu0 0.0
        %1811 = vmatpush1.msra.mxu0 0.0
        %1812 = vmatprep.subr.mxu0 0.0
        %1813 = vmatpush1.msra.mxu0 0.0
        %1814 = vmatprep.subr.mxu0 0.0
        %1815 = vmatpush1.msra.mxu0 0.0
        %1816 = vmatprep.subr.mxu0 0.0
        %1817 = vmatpush1.msra.mxu0 0.0
        %1818 = vmatprep.subr.mxu0 0.0
        %1819 = vmatpush1.msra.mxu0 0.0
        %1820 = vmatprep.subr.mxu0 0.0
        %1821 = vmatpush1.msra.mxu0 0.0
        %1822 = vmatprep.subr.mxu0 0.0
        %1823 = vmatpush1.msra.mxu0 0.0
        %1824 = vmatprep.subr.mxu0 0.0
        %1825 = vmatpush1.msra.mxu0 0.0
        %1826 = vmatprep.subr.mxu0 0.0
        %1827 = vmatpush1.msra.mxu0 0.0
        %1828 = vmatprep.subr.mxu0 0.0
        %1829 = vmatpush1.msra.mxu0 0.0
        %1830 = vmatprep.subr.mxu0 0.0
        %1831 = vmatpush1.msra.mxu0 0.0
        %1832 = vmatprep.subr.mxu0 0.0
        %1833 = vmatpush1.msra.mxu0 0.0
        %1834 = vmatprep.subr.mxu0 0.0
        %1835 = vmatpush1.msra.mxu0 0.0
        %1836 = vmatprep.subr.mxu0 0.0
        %1837 = vmatpush1.msra.mxu0 0.0
        %1838 = vmatprep.subr.mxu0 0.0
        %1839 = vmatpush1.msra.mxu0 0.0
        %1840 = vmatprep.subr.mxu0 0.0
        %1841 = vmatpush1.msra.mxu0 0.0
        %1842 = vmatprep.subr.mxu0 0.0
        %1843 = vmatpush1.msra.mxu0 0.0
        %1844 = vmatprep.subr.mxu0 0.0
        %1845 = vmatpush1.msra.mxu0 0.0
        %1846 = vmatprep.subr.mxu0 0.0
        %1847 = vmatpush1.msra.mxu0 0.0
        %1848 = vmatprep.subr.mxu0 0.0
        %1849 = vmatpush1.msra.mxu0 0.0
        %1850 = vmatprep.subr.mxu0 0.0
        %1851 = vmatpush1.msra.mxu0 0.0
        %1852 = vmatprep.subr.mxu0 0.0
        %1853 = vmatpush1.msra.mxu0 0.0
        %1854 = vmatprep.mubr.f32.mxu0 0.0
        %1855 = vmatmul.mubr.f32.gmra.mrb[0].mxu0 %v1788
        %v1856 = vpop.f32.mrb[0].mxu0
        %v1857 = vadd.f32 %v1786, %v1856
        %v1858 = vpop.f32.mrb[0].mxu0
        %1859 = vdwg.mxu0
        %v1860 = vadd.f32 %v1857, %v1682
        %v1861 = vsel %vm402, %v1860, 0.0
        %1862 = vadd.xlane.f32.xlu0 %v1861
        %v1863 = vpop.xlane.xlu0 %1862
        %v1864 = vmul.f32 %v1863, %v406
        %v1865 = vsub.f32 %v1860, %v1864
        %v1866 = vmul.f32 %v1865, %v1865
        %v1867 = vsel %vm402, %v1866, 0.0
        %1868 = vadd.xlane.f32.xlu0 %v1867
        %v1869 = vpop.xlane.xlu0 %1868
        %v1870 = vmul.f32 %v1869, %v406
        %v1871 = vadd.f32 %v1870, 1e-05
        %v1872 = vrsqrt.pop %v1871
        %v1873 = vmul.f32 %v1865, %v1872
        %v1874 = vlaneseq
        %v1875 = vshrl.u32 %v1874, 7
        %v1876 = vsub.s32 6, %v1875
        %v1877 = vrot.slane %v1160, %v1876
        %v1878 = vmul.f32 %v1873, %v1877
        %v1879 = vlaneseq
        %v1880 = vshrl.u32 %v1879, 7
        %v1881 = vsub.s32 7, %v1880
        %v1882 = vrot.slane %v1160, %v1881
        %v1883 = vadd.f32 %v1878, %v1882
        %1884 = vst.msk [vmem:[%s269] sm:$0xff] %vm402, %v1883
        %s1885 = sand.u32 %s181, 1
        %s1886 = scalar_lea.sflag [#allocation3], %s1885
        %s1887 = sand.u32 %s181, 1
        %s1888 = smul.addr %s1887, 8
        %s1889 = scalar_lea.vmem [#allocation2], %s1888
        // Predicated region
        $region49: #{roberta_embedding_forward.1} parent=47 // pred_check
          %p1890 = pneg %p191
        $region50: #{roberta_embedding_forward.1} parent=47 // pred_check_branch
          %1892 = sbr.rel (%p1890) target = $region52
        $region51: #{roberta_embedding_forward.1} parent=47 // pred_region
          %s1894 = ssub.s32 128, 128
          %1895 = vsyncadd %s1886, %s1894
          %s1896 = smul.addr %s21, 128
          %s1897 = scalar_lea.hbm %s7, %s1896
          %s1899 = sshll.u32 %s1889, 4
          %s1900 = int_to_ptr.vmem [resolvable:$true] %s1899
          %1902 = dma.vmem_to_hbm [thread:$0]  %s1900, 128, %s1897, %s1886
        $region52: #{roberta_embedding_forward.1} parent=47 // pred_fallthru
          _
      $region48: #{roberta_embedding_forward.1} parent=5 // pred_fallthru
        _
      %p1903 = scmp.le.s32.totalorder 2, %s16
      // Predicated region
      $region53: #{roberta_embedding_forward.1} parent=5 // pred_check
        %p1904 = pneg %p1903
      $region54: #{roberta_embedding_forward.1} parent=5 // pred_check_branch
        %1906 = sbr.rel (%p1904) target = $region56
      $region55: #{roberta_embedding_forward.1} parent=5 // pred_region
        %s1907 = ssub.s32 %s16, 2
        // Predicated region
        $region57: #{roberta_embedding_forward.1} parent=55 // pred_check
          %p1908 = pneg %p197
        $region58: #{roberta_embedding_forward.1} parent=55 // pred_check_branch
          %1910 = sbr.rel (%p1908) target = $region60
        $region59: #{roberta_embedding_forward.1} parent=55 // pred_region
          %s1911 = sand.u32 %s182, 1
          %s1912 = scalar_lea.sflag [#allocation3], %s1911
          %s1913 = sand.u32 %s182, 1
          %s1914 = smul.addr %s1913, 8
          %s1915 = scalar_lea.vmem [#allocation2], %s1914
          %1916 = dma.done %s1912, 128
        $region60: #{roberta_embedding_forward.1} parent=55 // pred_fallthru
          _
      $region56: #{roberta_embedding_forward.1} parent=5 // pred_fallthru
        _
    $region6: #{roberta_embedding_forward.1} parent=1 // loop_footer
      %s20 = sadd.s32 1, %s16
    $region7: #{roberta_embedding_forward.1} parent=1 // loop_footer_branch
      %15 = sbr.rel target = $region3
    $region8: #{roberta_embedding_forward.1} parent=1 // loop_exit
      _
    %1917 = vsyncpa [#allocation3], 1
    %s1918 = scalar_lea.sflag [#allocation3], 1
    %1919 = vsyncpa %s1918, 1

</llo_original>
